<compile_context>
chip_gen: v6e
topology: v6e:2x2x1
jax: 0.10.0
libtpu: 0.0.40
codegen_flags: <defaults>
</compile_context>

<pallas_src>
import functools

import jax
import jax.numpy as jnp
from jax import lax
from jax.experimental import pallas as pl
from jax.experimental.pallas import tpu as pltpu


def _glance_kernel(xq_ref, xkv_ref, g_ref, b_ref,
                   wq_ref, wkv_ref, wo_ref, bo_ref,
                   o_ref,
                   q_scr, m_scr, l_scr, acc_scr, k_cache, v_cache,
                   *, heads, dim_head, eps, n_valid, tk, needs_mask):
    qi = pl.program_id(1)
    ki = pl.program_id(2)
    last_kv = pl.num_programs(2) - 1
    bdims = ((0,), (0,))  # head-batched dot_generals

    def layer_norm(x_raw):
        # x_raw: (C, T) -- channels on sublanes, sequence tile on lanes.
        x = x_raw.astype(jnp.float32)
        mean = jnp.mean(x, axis=0, keepdims=True)
        var = jnp.mean((x - mean) ** 2, axis=0, keepdims=True)
        xn = (x - mean) / (jnp.sqrt(var) + eps) * g_ref[...] + b_ref[...]
        return xn.astype(jnp.bfloat16)

    # ---- per (batch, q-tile) init: project the q tile once, reset stats ----
    @pl.when(ki == 0)
    def _():
        xn_q = layer_norm(xq_ref[0])                                   # (C, TQ)
        xq_b = jnp.broadcast_to(xn_q[None], (heads,) + xn_q.shape)     # (H, C, TQ)
        q = lax.dot_general(wq_ref[...], xq_b, (((2,), (1,)), bdims),
                            preferred_element_type=jnp.float32)        # (H, D, TQ)
        q_scr[...] = q.astype(jnp.bfloat16)
        m_scr[...] = jnp.full(m_scr.shape, -jnp.inf, m_scr.dtype)
        l_scr[...] = jnp.zeros(l_scr.shape, l_scr.dtype)
        acc_scr[...] = jnp.zeros(acc_scr.shape, acc_scr.dtype)

    # ---- K/V for this kv tile: compute once per batch (qi == 0), cache ----
    @pl.when(qi == 0)
    def _():
        xn_kv = layer_norm(xkv_ref[0])                                 # (C, TK)
        xkv_b = jnp.broadcast_to(xn_kv[None], (heads,) + xn_kv.shape)  # (H, C, TK)
        kv = lax.dot_general(wkv_ref[...], xkv_b, (((2,), (1,)), bdims),
                             preferred_element_type=jnp.float32)       # (H, 2D, TK)
        v_cache[ki] = kv[:, dim_head:, :].astype(jnp.bfloat16)         # (H, D, TK)
        # K is cached pre-transposed to (TK, D): the QK^T product below is a
        # plain (untransposed) batched matmul, and the f32 transpose runs only
        # once per kv tile per batch.
        for h in range(heads):
            k_cache[ki, h] = kv[h, :dim_head, :].T.astype(jnp.bfloat16)

    k = k_cache[ki]                                                    # (H, TK, D)
    v = v_cache[ki]                                                    # (H, D, TK)

    # ---- online-softmax update: scores held as (H, TK, TQ) so the running
    #      max / sum / accumulator stay lane-dense over the query tile -------
    sim = lax.dot_general(k, q_scr[...], (((2,), (1,)), bdims),
                          preferred_element_type=jnp.float32)          # (H, TK, TQ)
    if needs_mask:
        key_idx = ki * tk + lax.broadcasted_iota(jnp.int32, (1, tk, 1), 1)
        sim = jnp.where(key_idx < n_valid, sim, -1e30)

    m_prev = m_scr[...]                                                # (H, 1, TQ)
    m_new = jnp.maximum(m_prev, jnp.max(sim, axis=1, keepdims=True))
    alpha = jnp.exp(m_prev - m_new)                                    # (H, 1, TQ)
    p = jnp.exp(sim - m_new)                                           # (H, TK, TQ)
    l_scr[...] = alpha * l_scr[...] + jnp.sum(p, axis=1, keepdims=True)
    pv = lax.dot_general(v, p.astype(jnp.bfloat16), (((2,), (1,)), bdims),
                         preferred_element_type=jnp.float32)           # (H, D, TQ)
    acc_scr[...] = alpha * acc_scr[...] + pv
    m_scr[...] = m_new

    # ---- finalize: normalize, fused (H*D)-deep output projection, bias -----
    @pl.when(ki == last_kv)
    def _():
        inv_l = pl.reciprocal(l_scr[...], approx=True)                 # (H, 1, TQ)
        attn = (acc_scr[...] * inv_l).reshape(heads * dim_head,
                                              acc_scr.shape[-1])       # (H*D, TQ)
        y = lax.dot_general(wo_ref[...], attn.astype(jnp.bfloat16),
                            (((1,), (0,)), ((), ())),
                            preferred_element_type=jnp.float32)        # (C, TQ)
        o_ref[0] = (y + bo_ref[...]).astype(o_ref.dtype)


def glance_forward(x, params, *, heads, dim_head, eps=1e-5):
    """x: (B, C, N) float32, PyTorch conv1d (NCW) layout. Returns (B, C, N)."""
    B, C, N = x.shape
    inner = heads * dim_head
    scale = dim_head ** (-0.5)

    # ---- one-time weight prep (trace level, free at runtime) ----
    wqkv = params["wqkv"]                                              # (3*inner, C)
    wq = (wqkv[:inner].reshape(heads, dim_head, C) * scale).astype(jnp.bfloat16)
    wk = wqkv[inner:2 * inner].reshape(heads, dim_head, C)
    wv = wqkv[2 * inner:].reshape(heads, dim_head, C)
    wkv = jnp.concatenate([wk, wv], axis=1).astype(jnp.bfloat16)       # (H, 2D, C)
    wo = params["wout"].astype(jnp.bfloat16)                           # (C, H*D)
    g = params["norm_g"].reshape(C, 1).astype(jnp.float32)
    b = params["norm_b"].reshape(C, 1).astype(jnp.float32)
    bo = params["bout"].reshape(C, 1).astype(jnp.float32)

    # ---- pad N to a multiple of 128; decoupled q / kv tile sizes ----
    n_pad = 128 * ((N + 127) // 128)
    tq = next(t for t in (512, 256, 128) if n_pad % t == 0)
    tk = next(t for t in (256, 128) if n_pad % t == 0)
    padded = n_pad != N
    if padded:
        x = jnp.pad(x, ((0, 0), (0, 0), (0, n_pad - N)))
    nq, nk = n_pad // tq, n_pad // tk

    kernel = functools.partial(_glance_kernel, heads=heads, dim_head=dim_head,
                               eps=eps, n_valid=N, tk=tk, needs_mask=padded)

    out = pl.pallas_call(
        kernel,
        out_shape=jax.ShapeDtypeStruct((B, C, n_pad), x.dtype),
        grid_spec=pltpu.PrefetchScalarGridSpec(
            num_scalar_prefetch=0,
            grid=(B, nq, nk),
            in_specs=[
                pl.BlockSpec((1, C, tq), lambda bb, qi, ki: (bb, 0, qi)),   # x (q tile)
                # kv tile: real index at qi == 0 (cache fill); constant block
                # afterwards so the kv stream is not re-DMA'd from HBM.
                pl.BlockSpec((1, C, tk),
                             lambda bb, qi, ki: (bb, 0, jnp.where(qi == 0, ki, 0))),
                pl.BlockSpec((C, 1), lambda bb, qi, ki: (0, 0)),            # LN gamma
                pl.BlockSpec((C, 1), lambda bb, qi, ki: (0, 0)),            # LN beta
                pl.BlockSpec((heads, dim_head, C), lambda bb, qi, ki: (0, 0, 0)),      # Wq
                pl.BlockSpec((heads, 2 * dim_head, C), lambda bb, qi, ki: (0, 0, 0)),  # Wkv
                pl.BlockSpec((C, inner), lambda bb, qi, ki: (0, 0)),        # Wout
                pl.BlockSpec((C, 1), lambda bb, qi, ki: (0, 0)),            # b_out
            ],
            out_specs=pl.BlockSpec((1, C, tq), lambda bb, qi, ki: (bb, 0, qi)),
            scratch_shapes=[
                pltpu.VMEM((heads, dim_head, tq), jnp.bfloat16),   # cached Q tile
                pltpu.VMEM((heads, 1, tq), jnp.float32),           # running max
                pltpu.VMEM((heads, 1, tq), jnp.float32),           # running sum
                pltpu.VMEM((heads, dim_head, tq), jnp.float32),    # output accum
                pltpu.VMEM((nk, heads, tk, dim_head), jnp.bfloat16),  # K cache (T, D)
                pltpu.VMEM((nk, heads, dim_head, tk), jnp.bfloat16),  # V cache (D, T)
            ],
        ),
        compiler_params=pltpu.CompilerParams(
            # q axis must be sequential so the qi==0 KV-cache fill is seen by
            # every q-tile on the same core; batch stays megacore-parallel.
            dimension_semantics=("parallel", "arbitrary", "arbitrary"),
            vmem_limit_bytes=48 * 1024 * 1024,
        ),
    )(x, x, g, b, wq, wkv, wo, bo)

    if padded:
        out = out[:, :, :N]
    return out


def glance_reference(x, params, *, heads, dim_head, eps=1e-5):
    """Pure-JAX f32 reference mirroring the PyTorch module."""
    B, C, N = x.shape
    inner = heads * dim_head
    scale = dim_head ** (-0.5)
    g = params["norm_g"].reshape(1, C, 1)
    b = params["norm_b"].reshape(1, C, 1)
    mean = jnp.mean(x, axis=1, keepdims=True)
    var = jnp.mean((x - mean) ** 2, axis=1, keepdims=True)
    xn = (x - mean) / (jnp.sqrt(var) + eps) * g + b
    qkv = jnp.einsum("oc,bcn->bon", params["wqkv"], xn)          # (B, 3*inner, N)
    q, k, v = jnp.split(qkv, 3, axis=1)

    def to_heads(t):  # (B, h*d, N) -> (B, h, N, d)
        return jnp.transpose(t.reshape(B, heads, dim_head, N), (0, 1, 3, 2))

    q, k, v = map(to_heads, (q, k, v))
    q = q * scale
    sim = jnp.einsum("bhid,bhjd->bhij", q, k)
    attn = jax.nn.softmax(sim, axis=-1)
    out = jnp.einsum("bhij,bhjd->bhid", attn, v)                 # (B, h, N, d)
    out = jnp.transpose(out, (0, 1, 3, 2)).reshape(B, inner, N)  # (B, h*d, N)
    out = jnp.einsum("oc,bcn->bon", params["wout"], out) + params["bout"].reshape(1, C, 1)
    return out


if __name__ == "__main__":
    B, dim = 2, 32
    heads, dim_head = 2, 16
    inner = heads * dim_head

    key = jax.random.PRNGKey(0)
    k1, k2, k3, kg, kb, kx1, kx2, kx3 = jax.random.split(key, 8)

    params = {
        "norm_g": 1.0 + 0.1 * jax.random.normal(kg, (dim,), jnp.float32),
        "norm_b": 0.1 * jax.random.normal(kb, (dim,), jnp.float32),
        "wqkv": 0.05 * jax.random.normal(k1, (3 * inner, dim), jnp.float32),
        "wout": 0.05 * jax.random.normal(k2, (dim, inner), jnp.float32),
        "bout": 0.05 * jax.random.normal(k3, (dim,), jnp.float32),
    }

    # Cases: tiny padded single tile; padded multi-tile (KV-cache reuse +
    # online softmax + key mask); aligned multi-tile with decoupled tq/tk.
    cases = (("N=8", 8, kx1), ("N=300", 300, kx2), ("N=1024", 1024, kx3))
    for name, n, kx in cases:
        x = jax.random.normal(kx, (B, dim, n), dtype=jnp.float32)
        y = jax.block_until_ready(
            glance_forward(x, params, heads=heads, dim_head=dim_head))
        y_ref = glance_reference(x, params, heads=heads, dim_head=dim_head)
        assert y.shape == (B, dim, n), (name, y.shape)
        # bf16 matmul operands (f32 accumulation) -> loosened tolerance.
        err = float(jnp.max(jnp.abs(y - y_ref)))
        assert jnp.allclose(y, y_ref, atol=2e-2, rtol=2e-2), (name, err)

    print("KERNEL_OK")
</pallas_src>

<mosaic_0001>
module attributes {stable_mosaic.version = 11 : i64} {
  func.func @_glance_kernel(%arg0: i32, %arg1: i32, %arg2: i32, %arg3: memref<1x32x128xf32, #tpu.memory_space<vmem>>, %arg4: memref<1x32x128xf32, #tpu.memory_space<vmem>>, %arg5: memref<32x1xf32, #tpu.memory_space<vmem>>, %arg6: memref<32x1xf32, #tpu.memory_space<vmem>>, %arg7: memref<2x16x32xbf16, #tpu.memory_space<vmem>>, %arg8: memref<2x32x32xbf16, #tpu.memory_space<vmem>>, %arg9: memref<32x32xbf16, #tpu.memory_space<vmem>>, %arg10: memref<32x1xf32, #tpu.memory_space<vmem>>, %arg11: memref<1x32x128xf32, #tpu.memory_space<vmem>>, %arg12: memref<2x16x128xbf16, #tpu.memory_space<vmem>>, %arg13: memref<2x1x128xf32, #tpu.memory_space<vmem>>, %arg14: memref<2x1x128xf32, #tpu.memory_space<vmem>>, %arg15: memref<2x16x128xf32, #tpu.memory_space<vmem>>, %arg16: memref<1x2x128x16xbf16, #tpu.memory_space<vmem>>, %arg17: memref<1x2x16x128xbf16, #tpu.memory_space<vmem>>) attributes {dimension_semantics = [#tpu.dimension_semantics<parallel>, #tpu.dimension_semantics<arbitrary>, #tpu.dimension_semantics<arbitrary>], iteration_bounds = array<i64: 2, 1, 1>, scalar_prefetch = 0 : i64, scratch_operands = 6 : i64, tpu.core_type = #tpu.core_type<tc>, window_params = [{transform_indices = @transform_0, window_bounds = array<i64: 1, 32, 128>}, {transform_indices = @transform_1, window_bounds = array<i64: 1, 32, 128>}, {pipeline_mode = #tpu.pipeline_mode<synchronous>, transform_indices = @transform_2, window_bounds = array<i64: 32, 1>}, {pipeline_mode = #tpu.pipeline_mode<synchronous>, transform_indices = @transform_3, window_bounds = array<i64: 32, 1>}, {pipeline_mode = #tpu.pipeline_mode<synchronous>, transform_indices = @transform_4, window_bounds = array<i64: 2, 16, 32>}, {pipeline_mode = #tpu.pipeline_mode<synchronous>, transform_indices = @transform_5, window_bounds = array<i64: 2, 32, 32>}, {pipeline_mode = #tpu.pipeline_mode<synchronous>, transform_indices = @transform_6, window_bounds = array<i64: 32, 32>}, {pipeline_mode = #tpu.pipeline_mode<synchronous>, transform_indices = @transform_7, window_bounds = array<i64: 32, 1>}, {transform_indices = @transform_8, window_bounds = array<i64: 1, 32, 128>}]} {
    %c0_i32 = arith.constant 0 : i32
    %0 = arith.cmpi eq, %arg2, %c0_i32 : i32
    %1 = arith.extui %0 : i1 to i32
    %c0_i32_0 = arith.constant 0 : i32
    %2 = arith.cmpi ne, %1, %c0_i32_0 : i32
    scf.if %2 {
      %c0_35 = arith.constant 0 : index
      %c0_36 = arith.constant 0 : index
      %c0_37 = arith.constant 0 : index
      %50 = vector.load %arg3[%c0_35, %c0_36, %c0_37] : memref<1x32x128xf32, #tpu.memory_space<vmem>>, vector<1x32x128xf32>
      %51 = vector.shape_cast %50 : vector<1x32x128xf32> to vector<32x128xf32>
      %cst_38 = arith.constant dense<0.000000e+00> : vector<128xf32>
      %52 = vector.multi_reduction <add>, %51, %cst_38 [0] : vector<32x128xf32> to vector<128xf32>
      %53 = vector.shape_cast %52 : vector<128xf32> to vector<1x128xf32>
      %cst_39 = arith.constant 3.200000e+01 : f32
      %54 = vector.broadcast %cst_39 : f32 to vector<1x128xf32>
      %55 = arith.divf %53, %54 : vector<1x128xf32>
      %56 = vector.broadcast %55 : vector<1x128xf32> to vector<32x128xf32>
      %57 = arith.subf %51, %56 : vector<32x128xf32>
      %58 = arith.mulf %57, %57 : vector<32x128xf32>
      %cst_40 = arith.constant dense<0.000000e+00> : vector<128xf32>
      %59 = vector.multi_reduction <add>, %58, %cst_40 [0] : vector<32x128xf32> to vector<128xf32>
      %60 = vector.shape_cast %59 : vector<128xf32> to vector<1x128xf32>
      %cst_41 = arith.constant 3.200000e+01 : f32
      %61 = vector.broadcast %cst_41 : f32 to vector<1x128xf32>
      %62 = arith.divf %60, %61 : vector<1x128xf32>
      %63 = vector.broadcast %55 : vector<1x128xf32> to vector<32x128xf32>
      %64 = arith.subf %51, %63 : vector<32x128xf32>
      %65 = math.sqrt %62 : vector<1x128xf32>
      %cst_42 = arith.constant 9.99999974E-6 : f32
      %66 = vector.broadcast %cst_42 : f32 to vector<1x128xf32>
      %67 = arith.addf %65, %66 : vector<1x128xf32>
      %68 = vector.broadcast %67 : vector<1x128xf32> to vector<32x128xf32>
      %69 = arith.divf %64, %68 : vector<32x128xf32>
      %c0_43 = arith.constant 0 : index
      %c0_44 = arith.constant 0 : index
      %70 = vector.load %arg5[%c0_43, %c0_44] : memref<32x1xf32, #tpu.memory_space<vmem>>, vector<32x1xf32>
      %71 = vector.broadcast %70 : vector<32x1xf32> to vector<32x128xf32>
      %72 = arith.mulf %69, %71 : vector<32x128xf32>
      %c0_45 = arith.constant 0 : index
      %c0_46 = arith.constant 0 : index
      %73 = vector.load %arg6[%c0_45, %c0_46] : memref<32x1xf32, #tpu.memory_space<vmem>>, vector<32x1xf32>
      %74 = vector.broadcast %73 : vector<32x1xf32> to vector<32x128xf32>
      %75 = arith.addf %72, %74 : vector<32x128xf32>
      %76 = arith.truncf %75 : vector<32x128xf32> to vector<32x128xbf16>
      %77 = vector.shape_cast %76 : vector<32x128xbf16> to vector<1x32x128xbf16>
      %78 = vector.shape_cast %77 : vector<1x32x128xbf16> to vector<1x32x128xbf16>
      %79 = vector.broadcast %78 : vector<1x32x128xbf16> to vector<2x32x128xbf16>
      %c0_47 = arith.constant 0 : index
      %c0_48 = arith.constant 0 : index
      %c0_49 = arith.constant 0 : index
      %80 = vector.load %arg7[%c0_47, %c0_48, %c0_49] : memref<2x16x32xbf16, #tpu.memory_space<vmem>>, vector<2x16x32xbf16>
      %cst_50 = arith.constant dense<0.000000e+00> : vector<2x16x128xf32>
      %81 = tpu.matmul %80, %79, %cst_50 {dimension_numbers = #tpu.dot_dimension_numbers<[2], [1], [1], [2], [0, 0, 0, 1, 1, 2], [0], [0]>} : vector<2x16x32xbf16>, vector<2x32x128xbf16>, vector<2x16x128xf32> -> vector<2x16x128xf32>
      %82 = arith.truncf %81 : vector<2x16x128xf32> to vector<2x16x128xbf16>
      %c0_51 = arith.constant 0 : index
      %c0_52 = arith.constant 0 : index
      %c0_53 = arith.constant 0 : index
      %83 = vector.load %arg12[%c0_51, %c0_52, %c0_53] : memref<2x16x128xbf16, #tpu.memory_space<vmem>>, vector<2x16x128xbf16>
      tpu.vector_store %arg12[%c0_51, %c0_52, %c0_53], %82 {strides = array<i32>} : memref<2x16x128xbf16, #tpu.memory_space<vmem>>, vector<2x16x128xbf16>,
      %cst_54 = arith.constant 0xFF800000 : f32
      %84 = vector.broadcast %cst_54 : f32 to vector<2x1x128xf32>
      %c0_55 = arith.constant 0 : index
      %c0_56 = arith.constant 0 : index
      %c0_57 = arith.constant 0 : index
      %85 = vector.load %arg13[%c0_55, %c0_56, %c0_57] : memref<2x1x128xf32, #tpu.memory_space<vmem>>, vector<2x1x128xf32>
      tpu.vector_store %arg13[%c0_55, %c0_56, %c0_57], %84 {strides = array<i32>} : memref<2x1x128xf32, #tpu.memory_space<vmem>>, vector<2x1x128xf32>,
      %cst_58 = arith.constant 0.000000e+00 : f32
      %86 = vector.broadcast %cst_58 : f32 to vector<2x1x128xf32>
      %c0_59 = arith.constant 0 : index
      %c0_60 = arith.constant 0 : index
      %c0_61 = arith.constant 0 : index
      %87 = vector.load %arg14[%c0_59, %c0_60, %c0_61] : memref<2x1x128xf32, #tpu.memory_space<vmem>>, vector<2x1x128xf32>
      tpu.vector_store %arg14[%c0_59, %c0_60, %c0_61], %86 {strides = array<i32>} : memref<2x1x128xf32, #tpu.memory_space<vmem>>, vector<2x1x128xf32>,
      %cst_62 = arith.constant 0.000000e+00 : f32
      %88 = vector.broadcast %cst_62 : f32 to vector<2x16x128xf32>
      %c0_63 = arith.constant 0 : index
      %c0_64 = arith.constant 0 : index
      %c0_65 = arith.constant 0 : index
      %89 = vector.load %arg15[%c0_63, %c0_64, %c0_65] : memref<2x16x128xf32, #tpu.memory_space<vmem>>, vector<2x16x128xf32>
      tpu.vector_store %arg15[%c0_63, %c0_64, %c0_65], %88 {strides = array<i32>} : memref<2x16x128xf32, #tpu.memory_space<vmem>>, vector<2x16x128xf32>,
    } else {
    }
    %c0_i32_1 = arith.constant 0 : i32
    %3 = arith.cmpi eq, %arg1, %c0_i32_1 : i32
    %4 = arith.extui %3 : i1 to i32
    %c0_i32_2 = arith.constant 0 : i32
    %5 = arith.cmpi ne, %4, %c0_i32_2 : i32
    scf.if %5 {
      %c0_35 = arith.constant 0 : index
      %c0_36 = arith.constant 0 : index
      %c0_37 = arith.constant 0 : index
      %50 = vector.load %arg4[%c0_35, %c0_36, %c0_37] : memref<1x32x128xf32, #tpu.memory_space<vmem>>, vector<1x32x128xf32>
      %51 = vector.shape_cast %50 : vector<1x32x128xf32> to vector<32x128xf32>
      %cst_38 = arith.constant dense<0.000000e+00> : vector<128xf32>
      %52 = vector.multi_reduction <add>, %51, %cst_38 [0] : vector<32x128xf32> to vector<128xf32>
      %53 = vector.shape_cast %52 : vector<128xf32> to vector<1x128xf32>
      %cst_39 = arith.constant 3.200000e+01 : f32
      %54 = vector.broadcast %cst_39 : f32 to vector<1x128xf32>
      %55 = arith.divf %53, %54 : vector<1x128xf32>
      %56 = vector.broadcast %55 : vector<1x128xf32> to vector<32x128xf32>
      %57 = arith.subf %51, %56 : vector<32x128xf32>
      %58 = arith.mulf %57, %57 : vector<32x128xf32>
      %cst_40 = arith.constant dense<0.000000e+00> : vector<128xf32>
      %59 = vector.multi_reduction <add>, %58, %cst_40 [0] : vector<32x128xf32> to vector<128xf32>
      %60 = vector.shape_cast %59 : vector<128xf32> to vector<1x128xf32>
      %cst_41 = arith.constant 3.200000e+01 : f32
      %61 = vector.broadcast %cst_41 : f32 to vector<1x128xf32>
      %62 = arith.divf %60, %61 : vector<1x128xf32>
      %63 = vector.broadcast %55 : vector<1x128xf32> to vector<32x128xf32>
      %64 = arith.subf %51, %63 : vector<32x128xf32>
      %65 = math.sqrt %62 : vector<1x128xf32>
      %cst_42 = arith.constant 9.99999974E-6 : f32
      %66 = vector.broadcast %cst_42 : f32 to vector<1x128xf32>
      %67 = arith.addf %65, %66 : vector<1x128xf32>
      %68 = vector.broadcast %67 : vector<1x128xf32> to vector<32x128xf32>
      %69 = arith.divf %64, %68 : vector<32x128xf32>
      %c0_43 = arith.constant 0 : index
      %c0_44 = arith.constant 0 : index
      %70 = vector.load %arg5[%c0_43, %c0_44] : memref<32x1xf32, #tpu.memory_space<vmem>>, vector<32x1xf32>
      %71 = vector.broadcast %70 : vector<32x1xf32> to vector<32x128xf32>
      %72 = arith.mulf %69, %71 : vector<32x128xf32>
      %c0_45 = arith.constant 0 : index
      %c0_46 = arith.constant 0 : index
      %73 = vector.load %arg6[%c0_45, %c0_46] : memref<32x1xf32, #tpu.memory_space<vmem>>, vector<32x1xf32>
      %74 = vector.broadcast %73 : vector<32x1xf32> to vector<32x128xf32>
      %75 = arith.addf %72, %74 : vector<32x128xf32>
      %76 = arith.truncf %75 : vector<32x128xf32> to vector<32x128xbf16>
      %77 = vector.shape_cast %76 : vector<32x128xbf16> to vector<1x32x128xbf16>
      %78 = vector.shape_cast %77 : vector<1x32x128xbf16> to vector<1x32x128xbf16>
      %79 = vector.broadcast %78 : vector<1x32x128xbf16> to vector<2x32x128xbf16>
      %c0_47 = arith.constant 0 : index
      %c0_48 = arith.constant 0 : index
      %c0_49 = arith.constant 0 : index
      %80 = vector.load %arg8[%c0_47, %c0_48, %c0_49] : memref<2x32x32xbf16, #tpu.memory_space<vmem>>, vector<2x32x32xbf16>
      %cst_50 = arith.constant dense<0.000000e+00> : vector<2x32x128xf32>
      %81 = tpu.matmul %80, %79, %cst_50 {dimension_numbers = #tpu.dot_dimension_numbers<[2], [1], [1], [2], [0, 0, 0, 1, 1, 2], [0], [0]>} : vector<2x32x32xbf16>, vector<2x32x128xbf16>, vector<2x32x128xf32> -> vector<2x32x128xf32>
      %82 = vector.extract_strided_slice %81 {offsets = [0, 16, 0], sizes = [2, 16, 128], strides = [1, 1, 1]} : vector<2x32x128xf32> to vector<2x16x128xf32>
      %83 = arith.truncf %82 : vector<2x16x128xf32> to vector<2x16x128xbf16>
      %84 = arith.index_cast %arg2 : i32 to index
      %c0_51 = arith.constant 0 : index
      %c0_52 = arith.constant 0 : index
      %c0_53 = arith.constant 0 : index
      %85 = vector.load %arg17[%84, %c0_51, %c0_52, %c0_53] : memref<1x2x16x128xbf16, #tpu.memory_space<vmem>>, vector<1x2x16x128xbf16>
      %86 = vector.shape_cast %85 : vector<1x2x16x128xbf16> to vector<2x16x128xbf16>
      %87 = vector.shape_cast %83 : vector<2x16x128xbf16> to vector<1x2x16x128xbf16>
      tpu.vector_store %arg17[%84, %c0_51, %c0_52, %c0_53], %87 {strides = array<i32>} : memref<1x2x16x128xbf16, #tpu.memory_space<vmem>>, vector<1x2x16x128xbf16>,
      %88 = vector.extract_strided_slice %81 {offsets = [0, 0, 0], sizes = [1, 16, 128], strides = [1, 1, 1]} : vector<2x32x128xf32> to vector<1x16x128xf32>
      %89 = vector.shape_cast %88 : vector<1x16x128xf32> to vector<16x128xf32>
      %90 = tpu.transpose %89, [1, 0] : vector<16x128xf32> -> vector<128x16xf32>
      %91 = arith.truncf %90 : vector<128x16xf32> to vector<128x16xbf16>
      %92 = arith.index_cast %arg2 : i32 to index
      %c0_54 = arith.constant 0 : index
      %c0_55 = arith.constant 0 : index
      %c0_56 = arith.constant 0 : index
      %93 = vector.load %arg16[%92, %c0_54, %c0_55, %c0_56] : memref<1x2x128x16xbf16, #tpu.memory_space<vmem>>, vector<1x1x128x16xbf16>
      %94 = vector.shape_cast %93 : vector<1x1x128x16xbf16> to vector<128x16xbf16>
      %95 = vector.shape_cast %91 : vector<128x16xbf16> to vector<1x1x128x16xbf16>
      tpu.vector_store %arg16[%92, %c0_54, %c0_55, %c0_56], %95 {strides = array<i32>} : memref<1x2x128x16xbf16, #tpu.memory_space<vmem>>, vector<1x1x128x16xbf16>,
      %96 = vector.extract_strided_slice %81 {offsets = [1, 0, 0], sizes = [1, 16, 128], strides = [1, 1, 1]} : vector<2x32x128xf32> to vector<1x16x128xf32>
      %97 = vector.shape_cast %96 : vector<1x16x128xf32> to vector<16x128xf32>
      %98 = tpu.transpose %97, [1, 0] : vector<16x128xf32> -> vector<128x16xf32>
      %99 = arith.truncf %98 : vector<128x16xf32> to vector<128x16xbf16>
      %100 = arith.index_cast %arg2 : i32 to index
      %c1 = arith.constant 1 : index
      %c0_57 = arith.constant 0 : index
      %c0_58 = arith.constant 0 : index
      %101 = vector.load %arg16[%100, %c1, %c0_57, %c0_58] : memref<1x2x128x16xbf16, #tpu.memory_space<vmem>>, vector<1x1x128x16xbf16>
      %102 = vector.shape_cast %101 : vector<1x1x128x16xbf16> to vector<128x16xbf16>
      %103 = vector.shape_cast %99 : vector<128x16xbf16> to vector<1x1x128x16xbf16>
      tpu.vector_store %arg16[%100, %c1, %c0_57, %c0_58], %103 {strides = array<i32>} : memref<1x2x128x16xbf16, #tpu.memory_space<vmem>>, vector<1x1x128x16xbf16>,
    } else {
    }
    %6 = arith.index_cast %arg2 : i32 to index
    %c0 = arith.constant 0 : index
    %c0_3 = arith.constant 0 : index
    %c0_4 = arith.constant 0 : index
    %7 = vector.load %arg16[%6, %c0, %c0_3, %c0_4] : memref<1x2x128x16xbf16, #tpu.memory_space<vmem>>, vector<1x2x128x16xbf16>
    %8 = vector.shape_cast %7 : vector<1x2x128x16xbf16> to vector<2x128x16xbf16>
    %9 = arith.index_cast %arg2 : i32 to index
    %c0_5 = arith.constant 0 : index
    %c0_6 = arith.constant 0 : index
    %c0_7 = arith.constant 0 : index
    %10 = vector.load %arg17[%9, %c0_5, %c0_6, %c0_7] : memref<1x2x16x128xbf16, #tpu.memory_space<vmem>>, vector<1x2x16x128xbf16>
    %11 = vector.shape_cast %10 : vector<1x2x16x128xbf16> to vector<2x16x128xbf16>
    %c0_8 = arith.constant 0 : index
    %c0_9 = arith.constant 0 : index
    %c0_10 = arith.constant 0 : index
    %12 = vector.load %arg12[%c0_8, %c0_9, %c0_10] : memref<2x16x128xbf16, #tpu.memory_space<vmem>>, vector<2x16x128xbf16>
    %cst = arith.constant dense<0.000000e+00> : vector<2x128x128xf32>
    %13 = tpu.matmul %8, %12, %cst {dimension_numbers = #tpu.dot_dimension_numbers<[2], [1], [1], [2], [0, 0, 0, 1, 1, 2], [0], [0]>} : vector<2x128x16xbf16>, vector<2x16x128xbf16>, vector<2x128x128xf32> -> vector<2x128x128xf32>
    %c128_i32 = arith.constant 128 : i32
    %14 = arith.muli %arg2, %c128_i32 : i32
    %15 = tpu.iota {dimensions = array<i32: 1>} : vector<1x128x1xi32>
    %16 = vector.broadcast %14 : i32 to vector<1x128x1xi32>
    %17 = arith.addi %16, %15 : vector<1x128x1xi32>
    %c8_i32 = arith.constant 8 : i32
    %18 = vector.broadcast %c8_i32 : i32 to vector<1x128x1xi32>
    %19 = arith.cmpi slt, %17, %18 : vector<1x128x1xi32>
    %cst_11 = arith.constant -1.000000e+30 : f32
    %20 = vector.shape_cast %19 : vector<1x128x1xi1> to vector<1x128x1xi1>
    %21 = vector.broadcast %20 : vector<1x128x1xi1> to vector<2x128x128xi1>
    %22 = vector.broadcast %cst_11 : f32 to vector<2x128x128xf32>
    %23 = arith.select %21, %13, %22 : vector<2x128x128xi1>, vector<2x128x128xf32>
    %c0_12 = arith.constant 0 : index
    %c0_13 = arith.constant 0 : index
    %c0_14 = arith.constant 0 : index
    %24 = vector.load %arg13[%c0_12, %c0_13, %c0_14] : memref<2x1x128xf32, #tpu.memory_space<vmem>>, vector<2x1x128xf32>
    %cst_15 = arith.constant dense<0xFF800000> : vector<2x128xf32>
    %25 = vector.multi_reduction <maximumf>, %23, %cst_15 [1] : vector<2x128x128xf32> to vector<2x128xf32>
    %26 = vector.shape_cast %25 : vector<2x128xf32> to vector<2x1x128xf32>
    %27 = arith.maximumf %24, %26 : vector<2x1x128xf32>
    %28 = arith.subf %24, %27 : vector<2x1x128xf32>
    %29 = math.exp %28 : vector<2x1x128xf32>
    %30 = vector.broadcast %27 : vector<2x1x128xf32> to vector<2x128x128xf32>
    %31 = arith.subf %23, %30 : vector<2x128x128xf32>
    %32 = math.exp %31 : vector<2x128x128xf32>
    %c0_16 = arith.constant 0 : index
    %c0_17 = arith.constant 0 : index
    %c0_18 = arith.constant 0 : index
    %33 = vector.load %arg14[%c0_16, %c0_17, %c0_18] : memref<2x1x128xf32, #tpu.memory_space<vmem>>, vector<2x1x128xf32>
    %34 = arith.mulf %29, %33 : vector<2x1x128xf32>
    %cst_19 = arith.constant dense<0.000000e+00> : vector<2x128xf32>
    %35 = vector.multi_reduction <add>, %32, %cst_19 [1] : vector<2x128x128xf32> to vector<2x128xf32>
    %36 = vector.shape_cast %35 : vector<2x128xf32> to vector<2x1x128xf32>
    %37 = arith.addf %34, %36 : vector<2x1x128xf32>
    %c0_20 = arith.constant 0 : index
    %c0_21 = arith.constant 0 : index
    %c0_22 = arith.constant 0 : index
    %38 = vector.load %arg14[%c0_20, %c0_21, %c0_22] : memref<2x1x128xf32, #tpu.memory_space<vmem>>, vector<2x1x128xf32>
    tpu.vector_store %arg14[%c0_20, %c0_21, %c0_22], %37 {strides = array<i32>} : memref<2x1x128xf32, #tpu.memory_space<vmem>>, vector<2x1x128xf32>,
    %39 = arith.truncf %32 : vector<2x128x128xf32> to vector<2x128x128xbf16>
    %cst_23 = arith.constant dense<0.000000e+00> : vector<2x16x128xf32>
    %40 = tpu.matmul %11, %39, %cst_23 {dimension_numbers = #tpu.dot_dimension_numbers<[2], [1], [1], [2], [0, 0, 0, 1, 1, 2], [0], [0]>} : vector<2x16x128xbf16>, vector<2x128x128xbf16>, vector<2x16x128xf32> -> vector<2x16x128xf32>
    %c0_24 = arith.constant 0 : index
    %c0_25 = arith.constant 0 : index
    %c0_26 = arith.constant 0 : index
    %41 = vector.load %arg15[%c0_24, %c0_25, %c0_26] : memref<2x16x128xf32, #tpu.memory_space<vmem>>, vector<2x16x128xf32>
    %42 = vector.broadcast %29 : vector<2x1x128xf32> to vector<2x16x128xf32>
    %43 = arith.mulf %42, %41 : vector<2x16x128xf32>
    %44 = arith.addf %43, %40 : vector<2x16x128xf32>
    %c0_27 = arith.constant 0 : index
    %c0_28 = arith.constant 0 : index
    %c0_29 = arith.constant 0 : index
    %45 = vector.load %arg15[%c0_27, %c0_28, %c0_29] : memref<2x16x128xf32, #tpu.memory_space<vmem>>, vector<2x16x128xf32>
    tpu.vector_store %arg15[%c0_27, %c0_28, %c0_29], %44 {strides = array<i32>} : memref<2x16x128xf32, #tpu.memory_space<vmem>>, vector<2x16x128xf32>,
    %c0_30 = arith.constant 0 : index
    %c0_31 = arith.constant 0 : index
    %c0_32 = arith.constant 0 : index
    %46 = vector.load %arg13[%c0_30, %c0_31, %c0_32] : memref<2x1x128xf32, #tpu.memory_space<vmem>>, vector<2x1x128xf32>
    tpu.vector_store %arg13[%c0_30, %c0_31, %c0_32], %27 {strides = array<i32>} : memref<2x1x128xf32, #tpu.memory_space<vmem>>, vector<2x1x128xf32>,
    %c0_i32_33 = arith.constant 0 : i32
    %47 = arith.cmpi eq, %arg2, %c0_i32_33 : i32
    %48 = arith.extui %47 : i1 to i32
    %c0_i32_34 = arith.constant 0 : i32
    %49 = arith.cmpi ne, %48, %c0_i32_34 : i32
    scf.if %49 {
      %c0_35 = arith.constant 0 : index
      %c0_36 = arith.constant 0 : index
      %c0_37 = arith.constant 0 : index
      %50 = vector.load %arg14[%c0_35, %c0_36, %c0_37] : memref<2x1x128xf32, #tpu.memory_space<vmem>>, vector<2x1x128xf32>
      %51 = tpu.reciprocal %50 {approx = true} : vector<2x1x128xf32> -> vector<2x1x128xf32>
      %c0_38 = arith.constant 0 : index
      %c0_39 = arith.constant 0 : index
      %c0_40 = arith.constant 0 : index
      %52 = vector.load %arg15[%c0_38, %c0_39, %c0_40] : memref<2x16x128xf32, #tpu.memory_space<vmem>>, vector<2x16x128xf32>
      %53 = vector.broadcast %51 : vector<2x1x128xf32> to vector<2x16x128xf32>
      %54 = arith.mulf %52, %53 : vector<2x16x128xf32>
      %55 = vector.shape_cast %54 : vector<2x16x128xf32> to vector<32x128xf32>
      %c0_41 = arith.constant 0 : index
      %c0_42 = arith.constant 0 : index
      %56 = vector.load %arg9[%c0_41, %c0_42] : memref<32x32xbf16, #tpu.memory_space<vmem>>, vector<32x32xbf16>
      %57 = arith.truncf %55 : vector<32x128xf32> to vector<32x128xbf16>
      %cst_43 = arith.constant dense<0.000000e+00> : vector<32x128xf32>
      %58 = tpu.matmul %56, %57, %cst_43 {dimension_numbers = #tpu.dot_dimension_numbers<[1], [0], [0], [1], [0, 0, 1, 1], [], []>} : vector<32x32xbf16>, vector<32x128xbf16>, vector<32x128xf32> -> vector<32x128xf32>
      %c0_44 = arith.constant 0 : index
      %c0_45 = arith.constant 0 : index
      %59 = vector.load %arg10[%c0_44, %c0_45] : memref<32x1xf32, #tpu.memory_space<vmem>>, vector<32x1xf32>
      %60 = vector.broadcast %59 : vector<32x1xf32> to vector<32x128xf32>
      %61 = arith.addf %58, %60 : vector<32x128xf32>
      %c0_46 = arith.constant 0 : index
      %c0_47 = arith.constant 0 : index
      %c0_48 = arith.constant 0 : index
      %62 = vector.load %arg11[%c0_46, %c0_47, %c0_48] : memref<1x32x128xf32, #tpu.memory_space<vmem>>, vector<1x32x128xf32>
      %63 = vector.shape_cast %62 : vector<1x32x128xf32> to vector<32x128xf32>
      %64 = vector.shape_cast %61 : vector<32x128xf32> to vector<1x32x128xf32>
      tpu.vector_store %arg11[%c0_46, %c0_47, %c0_48], %64 {strides = array<i32>} : memref<1x32x128xf32, #tpu.memory_space<vmem>>, vector<1x32x128xf32>,
    } else {
    }
    return
  }
  func.func @transform_0(%arg0: i32, %arg1: i32, %arg2: i32) -> (i32, i32, i32) {
    %c0_i32 = arith.constant 0 : i32
    %c0_i32_0 = arith.constant 0 : i32
    return %arg0, %c0_i32, %arg1 : i32, i32, i32
  }
  func.func @transform_1(%arg0: i32, %arg1: i32, %arg2: i32) -> (i32, i32, i32) {
    %c0_i32 = arith.constant 0 : i32
    %0 = arith.cmpi eq, %arg1, %c0_i32 : i32
    %c0_i32_0 = arith.constant 0 : i32
    %1 = arith.select %0, %arg2, %c0_i32_0 : i32
    %c0_i32_1 = arith.constant 0 : i32
    %c0_i32_2 = arith.constant 0 : i32
    return %arg0, %c0_i32_1, %1 : i32, i32, i32
  }
  func.func @transform_2(%arg0: i32, %arg1: i32, %arg2: i32) -> (i32, i32) {
    %c0_i32 = arith.constant 0 : i32
    %c0_i32_0 = arith.constant 0 : i32
    %c0_i32_1 = arith.constant 0 : i32
    return %c0_i32, %c0_i32_0 : i32, i32
  }
  func.func @transform_3(%arg0: i32, %arg1: i32, %arg2: i32) -> (i32, i32) {
    %c0_i32 = arith.constant 0 : i32
    %c0_i32_0 = arith.constant 0 : i32
    %c0_i32_1 = arith.constant 0 : i32
    return %c0_i32, %c0_i32_0 : i32, i32
  }
  func.func @transform_4(%arg0: i32, %arg1: i32, %arg2: i32) -> (i32, i32, i32) {
    %c0_i32 = arith.constant 0 : i32
    %c0_i32_0 = arith.constant 0 : i32
    %c0_i32_1 = arith.constant 0 : i32
    %c0_i32_2 = arith.constant 0 : i32
    return %c0_i32, %c0_i32_0, %c0_i32_1 : i32, i32, i32
  }
  func.func @transform_5(%arg0: i32, %arg1: i32, %arg2: i32) -> (i32, i32, i32) {
    %c0_i32 = arith.constant 0 : i32
    %c0_i32_0 = arith.constant 0 : i32
    %c0_i32_1 = arith.constant 0 : i32
    %c0_i32_2 = arith.constant 0 : i32
    return %c0_i32, %c0_i32_0, %c0_i32_1 : i32, i32, i32
  }
  func.func @transform_6(%arg0: i32, %arg1: i32, %arg2: i32) -> (i32, i32) {
    %c0_i32 = arith.constant 0 : i32
    %c0_i32_0 = arith.constant 0 : i32
    %c0_i32_1 = arith.constant 0 : i32
    return %c0_i32, %c0_i32_0 : i32, i32
  }
  func.func @transform_7(%arg0: i32, %arg1: i32, %arg2: i32) -> (i32, i32) {
    %c0_i32 = arith.constant 0 : i32
    %c0_i32_0 = arith.constant 0 : i32
    %c0_i32_1 = arith.constant 0 : i32
    return %c0_i32, %c0_i32_0 : i32, i32
  }
  func.func @transform_8(%arg0: i32, %arg1: i32, %arg2: i32) -> (i32, i32, i32) {
    %c0_i32 = arith.constant 0 : i32
    %c0_i32_0 = arith.constant 0 : i32
    return %arg0, %c0_i32, %arg1 : i32, i32, i32
  }
}

</mosaic_0001>

<llo_original>
// kernel: tpu_custom_call.1
$region0: #{tpu_custom_call.1}
  #allocation0 [shape = 'u32[]', space=smem, size = 0x4, offset = 0x4, fixed_abs, tag = 'smem constant byte address 0x4 - core index']
  #allocation1 [shape = 'u32[144,128]{1,0:T(1,128)}', space=vmem, size = 0x12000, scoped, tag = 'internal scratch']
  #allocation2 [shape = 'bf16[2,16,128]{2,1,0:T(8,128)(2,1)}', space=vmem, size = 0x2000, scoped, tag = 'scratch operand']
  #allocation3 [shape = 'f32[2,1,128]{2,1,0:T(1,128)}', space=vmem, size = 0x400, scoped, tag = 'scratch operand']
  #allocation4 [shape = 'f32[2,1,128]{2,1,0:T(1,128)}', space=vmem, size = 0x400, scoped, tag = 'scratch operand']
  #allocation5 [shape = 'f32[2,16,128]{2,1,0:T(8,128)}', space=vmem, size = 0x4000, scoped, tag = 'scratch operand']
  #allocation6 [shape = 'bf16[1,2,128,16]{3,2,1,0:T(8,128)(2,1)}', space=vmem, size = 0x10000, scoped, tag = 'scratch operand']
  #allocation7 [shape = 'bf16[1,2,16,128]{3,2,1,0:T(8,128)(2,1)}', space=vmem, size = 0x2000, scoped, tag = 'scratch operand']
  %s0 = inlined_call_operand.vmem [shape: f32[2,32,128], index: 0, kind: input, shape index: {}]
  %s1 = inlined_call_operand.hbm [shape: f32[2,32,128], index: 1, kind: input, shape index: {}]
  %s2 = inlined_call_operand.vmem [shape: f32[32,1], index: 2, kind: input, shape index: {}]
  %s3 = inlined_call_operand.vmem [shape: f32[32,1], index: 3, kind: input, shape index: {}]
  %s4 = inlined_call_operand.hbm [shape: bf16[2,16,32], index: 4, kind: input, shape index: {}]
  %s5 = inlined_call_operand.vmem [shape: bf16[2,32,32], index: 5, kind: input, shape index: {}]
  %s6 = inlined_call_operand.hbm [shape: bf16[32,32], index: 6, kind: input, shape index: {}]
  %s7 = inlined_call_operand.vmem [shape: f32[32,1], index: 7, kind: input, shape index: {}]
  %s8 = inlined_call_operand.hbm [shape: f32[2,32,128], index: 8, kind: output, shape index: {}]
  %s9 = sld [smem:[#allocation0]]
  $region89: #{tpu_custom_call.1} parent=0
    _
  %s11 = ssub.s32 1, %s9
  %s12 = scalar_select 0, %s11, %s9
  $region1: #{tpu_custom_call.1} parent=0
    #allocation8 [shape = 'u8[32768]{0}', space=vmem, size = 0x8000, scoped, tag = 'input window, operand 1']
    #allocation9 [shape = 's32[2]{0}', space=sflag, size = 0x8, scoped, tag = 'scoped memory for tpu_custom_call.1']
    #allocation10 [shape = 's32[2]{0}', space=sflag, size = 0x8, scoped, tag = 'scoped memory for tpu_custom_call.1']
    #allocation11 [shape = 'u8[8192]{0}', space=vmem, size = 0x2000, scoped, tag = 'input window, operand 4, single buffered']
    #allocation12 [shape = 's32[1]{0}', space=sflag, size = 0x4, scoped, tag = 'scoped memory for tpu_custom_call.1']
    #allocation13 [shape = 'u8[8192]{0}', space=vmem, size = 0x2000, scoped, tag = 'input window, operand 6, single buffered']
    #allocation14 [shape = 'u8[32768]{0}', space=vmem, size = 0x8000, scoped, tag = 'output window, operand 0']
    %13 = vsyncpa [#allocation9], 0
    %s14 = scalar_lea.sflag [#allocation9], 1
    %15 = vsyncpa %s14, 0
    %16 = vsyncpa [#allocation12], 0
    %17 = vsyncpa [#allocation10], 0
    %s18 = scalar_lea.sflag [#allocation10], 1
    %19 = vsyncpa %s18, 0
    loop: start=0, step=1, limit=4
    $region2: #{tpu_custom_call.1} parent=1 // loop_pre_header
      _
    $region3: #{tpu_custom_call.1} parent=1 // loop_header
      %s21 = sphi 0, %s25
      %p22 = scmp.ge.s32.totalorder %s21, 4
      %s28 = sphi 0, %s47
      %s29 = sphi 0, %s43
      %s30 = sphi 0, %s39
      %s31 = sphi 0, %s28
      %s32 = sphi 0, %s29
      %s33 = sphi 0, %s30
      %s34 = sphi 0, %s31
      %s35 = sphi 0, %s32
      %s36 = sphi 0, %s33
      %s52 = sphi 0, %s54
      %s55 = sphi 0, %s52
      %s56 = sphi 0, %s55
      %s72 = sphi 0, %s56
      %s84 = sphi 0, %s86
      %s87 = sphi 0, %s84
      %s88 = sphi 0, %s87
      %s104 = sphi 0, %s88
      %s108 = sphi 0, %s108
      %s110 = sphi 0, %s108
      %s111 = sphi 0, %s110
      %s125 = sphi 0, %s111
      %s129 = sphi 0, %s129
      %s131 = sphi 0, %s129
      %s132 = sphi 0, %s131
      %s146 = sphi 0, %s132
      %s150 = sphi 0, %s150
      %s152 = sphi 0, %s150
      %s153 = sphi 0, %s152
      %s167 = sphi 0, %s153
      %s171 = sphi 0, %s171
      %s173 = sphi 0, %s171
      %s174 = sphi 0, %s173
      %s188 = sphi 0, %s174
      %s192 = sphi 0, %s192
      %s194 = sphi 0, %s192
      %s195 = sphi 0, %s194
      %s209 = sphi 0, %s195
      %s213 = sphi 0, %s213
      %s215 = sphi 0, %s213
      %s216 = sphi 0, %s215
      %s230 = sphi 0, %s216
      %s238 = sphi 0, %s240
      %s241 = sphi 0, %s238
      %s242 = sphi 0, %s241
      %s258 = sphi 0, %s242
    $region4: #{tpu_custom_call.1} parent=1 // loop_header_branch
      %24 = sbr.rel (%p22) target = $region8
    $region5: #{tpu_custom_call.1} parent=1 // loop_body
      %s26 = ssub.s32 %s21, 1
      %s27 = ssub.s32 %s21, 2
      %s37 = sadd.s32 1, %s30
      %p38 = scmp.ge.s32.totalorder %s37, 1
      %s39 = scalar_select %p38, 0, %s37
      %s40 = sadd.s32 1, %s29
      %s41 = scalar_select %p38, %s40, %s29
      %p42 = scmp.ge.s32.totalorder %s41, 1
      %s43 = scalar_select %p42, 0, %s41
      %s44 = sadd.s32 1, %s28
      %s45 = scalar_select %p42, %s44, %s28
      %p46 = scmp.ge.s32.totalorder %s45, 2
      %s47 = scalar_select %p46, 0, %s45
      %s48 = ssub.s32 %s28, %s47
      %s49 = ssub.s32 %s29, %s43
      %s50 = sor.u32 %s48, %s49
      %p51 = scmp.eq.s32.totalorder %s50, 0
      %s53 = sadd.s32 %s52, 1
      %s54 = scalar_select %p51, %s52, %s53
      %p57 = pneg %p51
      %p58 = scmp.eq.s32.totalorder %s21, 1
      %p59 = por %p57, %p58
      %p60 = scmp.ne.s32.totalorder %s52, %s55
      %p61 = scmp.eq.s32.totalorder %s21, 0
      %p62 = por %p60, %p61
      %p63 = scmp.ne.s32.totalorder %s52, %s55
      %p64 = scmp.eq.s32.totalorder %s26, 1
      %p65 = por %p63, %p64
      %p66 = scmp.ne.s32.totalorder %s55, %s56
      %p67 = scmp.eq.s32.totalorder %s26, 0
      %p68 = por %p66, %p67
      %p69 = scmp.ne.s32.totalorder %s55, %s56
      %p70 = scmp.eq.s32.totalorder %s27, 1
      %p71 = por %p69, %p70
      %p73 = scmp.ne.s32.totalorder %s56, %s72
      %p74 = scmp.eq.s32.totalorder %s27, 0
      %p75 = por %p73, %p74
      %p76 = scmp.eq.s32.totalorder %s29, 0
      %s77 = scalar_select %p76, %s30, 0
      %p78 = scmp.eq.s32.totalorder %s43, 0
      %s79 = scalar_select %p78, %s39, 0
      %s80 = ssub.s32 %s28, %s47
      %s81 = ssub.s32 %s77, %s79
      %s82 = sor.u32 %s80, %s81
      %p83 = scmp.eq.s32.totalorder %s82, 0
      %s85 = sadd.s32 %s84, 1
      %s86 = scalar_select %p83, %s84, %s85
      %p89 = pneg %p83
      %p90 = scmp.eq.s32.totalorder %s21, 1
      %p91 = por %p89, %p90
      %p92 = scmp.ne.s32.totalorder %s84, %s87
      %p93 = scmp.eq.s32.totalorder %s21, 0
      %p94 = por %p92, %p93
      %p95 = scmp.ne.s32.totalorder %s84, %s87
      %p96 = scmp.eq.s32.totalorder %s26, 1
      %p97 = por %p95, %p96
      %p98 = scmp.ne.s32.totalorder %s87, %s88
      %p99 = scmp.eq.s32.totalorder %s26, 0
      %p100 = por %p98, %p99
      %p101 = scmp.ne.s32.totalorder %s87, %s88
      %p102 = scmp.eq.s32.totalorder %s27, 1
      %p103 = por %p101, %p102
      %p105 = scmp.ne.s32.totalorder %s88, %s104
      %p106 = scmp.eq.s32.totalorder %s27, 0
      %p107 = por %p105, %p106
      %s109 = sadd.s32 %s108, 1
      %p112 = scmp.eq.s32.totalorder %s21, 1
      %p113 = scmp.ne.s32.totalorder %s108, %s110
      %p114 = scmp.eq.s32.totalorder %s21, 0
      %p115 = por %p113, %p114
      %p116 = scmp.ne.s32.totalorder %s108, %s110
      %p117 = scmp.eq.s32.totalorder %s26, 1
      %p118 = por %p116, %p117
      %p119 = scmp.ne.s32.totalorder %s110, %s111
      %p120 = scmp.eq.s32.totalorder %s26, 0
      %p121 = por %p119, %p120
      %p122 = scmp.ne.s32.totalorder %s110, %s111
      %p123 = scmp.eq.s32.totalorder %s27, 1
      %p124 = por %p122, %p123
      %p126 = scmp.ne.s32.totalorder %s111, %s125
      %p127 = scmp.eq.s32.totalorder %s27, 0
      %p128 = por %p126, %p127
      %s130 = sadd.s32 %s129, 1
      %p133 = scmp.eq.s32.totalorder %s21, 1
      %p134 = scmp.ne.s32.totalorder %s129, %s131
      %p135 = scmp.eq.s32.totalorder %s21, 0
      %p136 = por %p134, %p135
      %p137 = scmp.ne.s32.totalorder %s129, %s131
      %p138 = scmp.eq.s32.totalorder %s26, 1
      %p139 = por %p137, %p138
      %p140 = scmp.ne.s32.totalorder %s131, %s132
      %p141 = scmp.eq.s32.totalorder %s26, 0
      %p142 = por %p140, %p141
      %p143 = scmp.ne.s32.totalorder %s131, %s132
      %p144 = scmp.eq.s32.totalorder %s27, 1
      %p145 = por %p143, %p144
      %p147 = scmp.ne.s32.totalorder %s132, %s146
      %p148 = scmp.eq.s32.totalorder %s27, 0
      %p149 = por %p147, %p148
      %s151 = sadd.s32 %s150, 1
      %p154 = scmp.eq.s32.totalorder %s21, 1
      %p155 = scmp.ne.s32.totalorder %s150, %s152
      %p156 = scmp.eq.s32.totalorder %s21, 0
      %p157 = por %p155, %p156
      %p158 = scmp.ne.s32.totalorder %s150, %s152
      %p159 = scmp.eq.s32.totalorder %s26, 1
      %p160 = por %p158, %p159
      %p161 = scmp.ne.s32.totalorder %s152, %s153
      %p162 = scmp.eq.s32.totalorder %s26, 0
      %p163 = por %p161, %p162
      %p164 = scmp.ne.s32.totalorder %s152, %s153
      %p165 = scmp.eq.s32.totalorder %s27, 1
      %p166 = por %p164, %p165
      %p168 = scmp.ne.s32.totalorder %s153, %s167
      %p169 = scmp.eq.s32.totalorder %s27, 0
      %p170 = por %p168, %p169
      %s172 = sadd.s32 %s171, 1
      %p175 = scmp.eq.s32.totalorder %s21, 1
      %p176 = scmp.ne.s32.totalorder %s171, %s173
      %p177 = scmp.eq.s32.totalorder %s21, 0
      %p178 = por %p176, %p177
      %p179 = scmp.ne.s32.totalorder %s171, %s173
      %p180 = scmp.eq.s32.totalorder %s26, 1
      %p181 = por %p179, %p180
      %p182 = scmp.ne.s32.totalorder %s173, %s174
      %p183 = scmp.eq.s32.totalorder %s26, 0
      %p184 = por %p182, %p183
      %p185 = scmp.ne.s32.totalorder %s173, %s174
      %p186 = scmp.eq.s32.totalorder %s27, 1
      %p187 = por %p185, %p186
      %p189 = scmp.ne.s32.totalorder %s174, %s188
      %p190 = scmp.eq.s32.totalorder %s27, 0
      %p191 = por %p189, %p190
      %s193 = sadd.s32 %s192, 1
      %p196 = scmp.eq.s32.totalorder %s21, 1
      %p197 = scmp.ne.s32.totalorder %s192, %s194
      %p198 = scmp.eq.s32.totalorder %s21, 0
      %p199 = por %p197, %p198
      %p200 = scmp.ne.s32.totalorder %s192, %s194
      %p201 = scmp.eq.s32.totalorder %s26, 1
      %p202 = por %p200, %p201
      %p203 = scmp.ne.s32.totalorder %s194, %s195
      %p204 = scmp.eq.s32.totalorder %s26, 0
      %p205 = por %p203, %p204
      %p206 = scmp.ne.s32.totalorder %s194, %s195
      %p207 = scmp.eq.s32.totalorder %s27, 1
      %p208 = por %p206, %p207
      %p210 = scmp.ne.s32.totalorder %s195, %s209
      %p211 = scmp.eq.s32.totalorder %s27, 0
      %p212 = por %p210, %p211
      %s214 = sadd.s32 %s213, 1
      %p217 = scmp.eq.s32.totalorder %s21, 1
      %p218 = scmp.ne.s32.totalorder %s213, %s215
      %p219 = scmp.eq.s32.totalorder %s21, 0
      %p220 = por %p218, %p219
      %p221 = scmp.ne.s32.totalorder %s213, %s215
      %p222 = scmp.eq.s32.totalorder %s26, 1
      %p223 = por %p221, %p222
      %p224 = scmp.ne.s32.totalorder %s215, %s216
      %p225 = scmp.eq.s32.totalorder %s26, 0
      %p226 = por %p224, %p225
      %p227 = scmp.ne.s32.totalorder %s215, %s216
      %p228 = scmp.eq.s32.totalorder %s27, 1
      %p229 = por %p227, %p228
      %p231 = scmp.ne.s32.totalorder %s216, %s230
      %p232 = scmp.eq.s32.totalorder %s27, 0
      %p233 = por %p231, %p232
      %s234 = ssub.s32 %s28, %s47
      %s235 = ssub.s32 %s29, %s43
      %s236 = sor.u32 %s234, %s235
      %p237 = scmp.eq.s32.totalorder %s236, 0
      %s239 = sadd.s32 %s238, 1
      %s240 = scalar_select %p237, %s238, %s239
      %p243 = pneg %p237
      %p244 = scmp.eq.s32.totalorder %s21, 1
      %p245 = por %p243, %p244
      %p246 = scmp.ne.s32.totalorder %s238, %s241
      %p247 = scmp.eq.s32.totalorder %s21, 0
      %p248 = por %p246, %p247
      %p249 = scmp.ne.s32.totalorder %s238, %s241
      %p250 = scmp.eq.s32.totalorder %s26, 1
      %p251 = por %p249, %p250
      %p252 = scmp.ne.s32.totalorder %s241, %s242
      %p253 = scmp.eq.s32.totalorder %s26, 0
      %p254 = por %p252, %p253
      %p255 = scmp.ne.s32.totalorder %s241, %s242
      %p256 = scmp.eq.s32.totalorder %s27, 1
      %p257 = por %p255, %p256
      %p259 = scmp.ne.s32.totalorder %s242, %s258
      %p260 = scmp.eq.s32.totalorder %s27, 0
      %p261 = por %p259, %p260
      %p262 = scmp.le.s32.totalorder 1, %s21
      %p263 = scmp.lt.s32.totalorder %s21, 3
      %p264 = pnand %p262, %p263
      %p265 = pneg %p264
      // Predicated region
      $region9: #{tpu_custom_call.1} parent=5 // pred_check
        _
      $region10: #{tpu_custom_call.1} parent=5 // pred_check_branch
        %267 = sbr.rel (%p264) target = $region12
      $region11: #{tpu_custom_call.1} parent=5 // pred_region
        %s268 = ssub.s32 %s21, 1
        // Predicated region
        $region13: #{tpu_custom_call.1} parent=11 // pred_check
          %p269 = pneg %p121
        $region14: #{tpu_custom_call.1} parent=11 // pred_check_branch
          %271 = sbr.rel (%p269) target = $region16
        $region15: #{tpu_custom_call.1} parent=11 // pred_region
          _
        $region16: #{tpu_custom_call.1} parent=11 // pred_fallthru
          _
        // Predicated region
        $region17: #{tpu_custom_call.1} parent=11 // pred_check
          %p272 = pneg %p142
        $region18: #{tpu_custom_call.1} parent=11 // pred_check_branch
          %274 = sbr.rel (%p272) target = $region20
        $region19: #{tpu_custom_call.1} parent=11 // pred_region
          _
        $region20: #{tpu_custom_call.1} parent=11 // pred_fallthru
          _
        // Predicated region
        $region21: #{tpu_custom_call.1} parent=11 // pred_check
          %p275 = pneg %p163
        $region22: #{tpu_custom_call.1} parent=11 // pred_check_branch
          %277 = sbr.rel (%p275) target = $region24
        $region23: #{tpu_custom_call.1} parent=11 // pred_region
          %s279 = ssub.s32 256, 256
          %280 = vsyncadd [#allocation12], %s279
          %s281 = sshll.u32 [#allocation11], 4
          %s282 = int_to_ptr.vmem [resolvable:$true] %s281
          %287 = dma.hbm_to_vmem [thread:$0]  %s4, 256, %s282, [#allocation12], 64, 64, 4
        $region24: #{tpu_custom_call.1} parent=11 // pred_fallthru
          _
        // Predicated region
        $region25: #{tpu_custom_call.1} parent=11 // pred_check
          %p288 = pneg %p184
        $region26: #{tpu_custom_call.1} parent=11 // pred_check_branch
          %290 = sbr.rel (%p288) target = $region28
        $region27: #{tpu_custom_call.1} parent=11 // pred_region
          _
        $region28: #{tpu_custom_call.1} parent=11 // pred_fallthru
          _
        // Predicated region
        $region29: #{tpu_custom_call.1} parent=11 // pred_check
          %p291 = pneg %p205
        $region30: #{tpu_custom_call.1} parent=11 // pred_check_branch
          %293 = sbr.rel (%p291) target = $region32
        $region31: #{tpu_custom_call.1} parent=11 // pred_region
          %s295 = ssub.s32 256, 256
          %296 = vsyncadd [#allocation12], %s295
          %s297 = sshll.u32 [#allocation13], 4
          %s298 = int_to_ptr.vmem [resolvable:$true] %s297
          %303 = dma.hbm_to_vmem [thread:$0]  %s6, 256, %s298, [#allocation12], 64, 64, 4
        $region32: #{tpu_custom_call.1} parent=11 // pred_fallthru
          _
        // Predicated region
        $region33: #{tpu_custom_call.1} parent=11 // pred_check
          %p304 = pneg %p226
        $region34: #{tpu_custom_call.1} parent=11 // pred_check_branch
          %306 = sbr.rel (%p304) target = $region36
        $region35: #{tpu_custom_call.1} parent=11 // pred_region
          _
        $region36: #{tpu_custom_call.1} parent=11 // pred_fallthru
          _
      $region12: #{tpu_custom_call.1} parent=5 // pred_fallthru
        _
      %p307 = scmp.lt.s32.totalorder %s21, 2
      // Predicated region
      $region37: #{tpu_custom_call.1} parent=5 // pred_check
        %p308 = pneg %p307
      $region38: #{tpu_custom_call.1} parent=5 // pred_check_branch
        %310 = sbr.rel (%p308) target = $region40
      $region39: #{tpu_custom_call.1} parent=5 // pred_region
        // Predicated region
        $region41: #{tpu_custom_call.1} parent=39 // pred_check
          %p311 = pneg %p62
        $region42: #{tpu_custom_call.1} parent=39 // pred_check_branch
          %313 = sbr.rel (%p311) target = $region44
        $region43: #{tpu_custom_call.1} parent=39 // pred_region
          %p314 = scmp.lt.s32.totalorder %s28, 1
          %s315 = scalar_select %p314, %s28, 1
          %p316 = scmp.lt.s32.totalorder %s29, 0
          %s317 = scalar_select %p316, %s29, 0
          %s318 = smul.addr %s315, 4
          %s319 = sadd.s32 %s317, %s318
          %s320 = smul.addr %s319, 8
          %s321 = scalar_lea.vmem %s0, %s320
        $region44: #{tpu_custom_call.1} parent=39 // pred_fallthru
          _
        // Predicated region
        $region45: #{tpu_custom_call.1} parent=39 // pred_check
          %p322 = pneg %p94
        $region46: #{tpu_custom_call.1} parent=39 // pred_check_branch
          %324 = sbr.rel (%p322) target = $region48
        $region47: #{tpu_custom_call.1} parent=39 // pred_region
          %s325 = sand.u32 %s84, 1
          %s326 = scalar_lea.sflag [#allocation9], %s325
          %s327 = sand.u32 %s84, 1
          %s328 = smul.addr %s327, 32
          %s329 = scalar_lea.vmem [#allocation8], %s328
          %p330 = scmp.eq.s32.totalorder %s29, 0
          %s331 = scalar_select %p330, %s30, 0
          %s333 = ssub.s32 512, 512
          %334 = vsyncadd %s326, %s333
          %s335 = smul.addr %s28, 4
          %s336 = sadd.s32 %s331, %s335
          %s337 = smul.addr %s336, 128
          %s338 = scalar_lea.hbm %s1, %s337
          %s339 = sshll.u32 %s329, 4
          %s340 = int_to_ptr.vmem [resolvable:$true] %s339
          %345 = dma.hbm_to_vmem [thread:$0]  %s338, 512, %s340, %s326, 128, 128, 8
        $region48: #{tpu_custom_call.1} parent=39 // pred_fallthru
          _
      $region40: #{tpu_custom_call.1} parent=5 // pred_fallthru
        _
      %p346 = scmp.le.s32.totalorder 1, %s21
      %p347 = scmp.lt.s32.totalorder %s21, 3
      %p348 = pnand %p346, %p347
      %p349 = pneg %p348
      // Predicated region
      $region49: #{tpu_custom_call.1} parent=5 // pred_check
        _
      $region50: #{tpu_custom_call.1} parent=5 // pred_check_branch
        %351 = sbr.rel (%p348) target = $region52
      $region51: #{tpu_custom_call.1} parent=5 // pred_region
        %s352 = ssub.s32 %s21, 1
        %s353 = sand.u32 %s87, 1
        %s354 = scalar_lea.sflag [#allocation9], %s353
        %s355 = sand.u32 %s87, 1
        %s356 = smul.addr %s355, 32
        %s357 = scalar_lea.vmem [#allocation8], %s356
        // Predicated region
        $region53: #{tpu_custom_call.1} parent=51 // pred_check
          %p358 = pneg %p100
        $region54: #{tpu_custom_call.1} parent=51 // pred_check_branch
          %360 = sbr.rel (%p358) target = $region56
        $region55: #{tpu_custom_call.1} parent=51 // pred_region
          %361 = dma.done %s354, 512
        $region56: #{tpu_custom_call.1} parent=51 // pred_fallthru
          _
        // Predicated region
        $region57: #{tpu_custom_call.1} parent=51 // pred_check
          %p362 = pneg %p163
        $region58: #{tpu_custom_call.1} parent=51 // pred_check_branch
          %364 = sbr.rel (%p362) target = $region60
        $region59: #{tpu_custom_call.1} parent=51 // pred_region
          %365 = dma.done [#allocation12], 256
        $region60: #{tpu_custom_call.1} parent=51 // pred_fallthru
          _
        // Predicated region
        $region61: #{tpu_custom_call.1} parent=51 // pred_check
          %p366 = pneg %p205
        $region62: #{tpu_custom_call.1} parent=51 // pred_check_branch
          %368 = sbr.rel (%p366) target = $region64
        $region63: #{tpu_custom_call.1} parent=51 // pred_region
          %369 = dma.done [#allocation12], 256
        $region64: #{tpu_custom_call.1} parent=51 // pred_fallthru
          _
        %p370 = scmp.lt.s32.totalorder %s31, 1
        %s371 = scalar_select %p370, %s31, 1
        %p372 = scmp.lt.s32.totalorder %s32, 0
        %s373 = scalar_select %p372, %s32, 0
        %s374 = smul.addr %s371, 4
        %s375 = sadd.s32 %s373, %s374
        %s376 = smul.addr %s375, 8
        %s377 = scalar_lea.vmem %s0, %s376
        %p378 = pneg %p68
        %p379 = pneg %p65
        %s380 = sand.u32 %s87, 1
        %s381 = scalar_lea.sflag [#allocation9], %s380
        %s382 = sand.u32 %s87, 1
        %s383 = smul.addr %s382, 32
        %s384 = scalar_lea.vmem [#allocation8], %s383
        %p385 = pneg %p100
        %p386 = pneg %p97
        %p387 = pneg %p121
        %p388 = pneg %p118
        %p389 = pneg %p142
        %p390 = pneg %p139
        %p391 = pneg %p163
        %p392 = pneg %p160
        %p393 = pneg %p184
        %p394 = pneg %p181
        %p395 = pneg %p205
        %p396 = pneg %p202
        %p397 = pneg %p226
        %p398 = pneg %p223
        %p399 = pneg %p254
        %p400 = pneg %p251
        %s401 = sand.u32 %s241, 1
        %s402 = scalar_lea.sflag [#allocation10], %s401
        %s403 = sand.u32 %s241, 1
        %s404 = smul.addr %s403, 32
        %s405 = scalar_lea.vmem [#allocation14], %s404
        %p406 = scmp.lt.s32.totalorder %s31, 1
        %s407 = scalar_select %p406, %s31, 1
        %p408 = scmp.lt.s32.totalorder %s32, 0
        %s409 = scalar_select %p408, %s32, 0
        %s410 = smul.addr %s407, 4
        %s411 = sadd.s32 %s409, %s410
        %s412 = smul.addr %s411, 8
        %s413 = scalar_lea.vmem %s0, %s412
        %p414 = scmp.eq.s32.totalorder %s32, 0
        %s415 = scalar_select %p414, %s33, 0
        %p417 = scmp.eq.s32.totalorder %s33, 0
        // Predicated region
        $region65: #{tpu_custom_call.1} parent=51 // pred_check
          %p418 = pneg %p417
        $region66: #{tpu_custom_call.1} parent=51 // pred_check_branch
          %420 = sbr.rel (%p418) target = $region68
        $region67: #{tpu_custom_call.1} parent=51 // pred_region
          %v421 = vld [vmem:[%s413] sm:$0xff]
          %v422 = vld [vmem:[%s413 + $0x8] sm:$0xff]
          %v423 = vld [vmem:[%s413 + $0x10] sm:$0xff]
          %v424 = vld [vmem:[%s413 + $0x18] sm:$0xff]
          %v425 = vadd.f32 %v421, %v422
          %v426 = vadd.f32 %v425, %v423
          %v427 = vadd.f32 %v426, %v424
          %v428 = vrot.slane %v427, 4
          %v429 = vadd.f32 %v427, %v428
          %v430 = vrot.slane %v429, 2
          %v431 = vadd.f32 %v429, %v430
          %v432 = vrot.slane %v431, 1
          %v433 = vadd.f32 %v431, %v432
          %v434 = vrcp.pop 32.0
          %v435 = vmul.f32 %v433, %v434
          %v436 = vsub.f32 %v421, %v435
          %v437 = vsub.f32 %v422, %v435
          %v438 = vsub.f32 %v423, %v435
          %v439 = vsub.f32 %v424, %v435
          %v440 = vmul.f32 %v436, %v436
          %v441 = vmul.f32 %v437, %v437
          %v442 = vmul.f32 %v438, %v438
          %v443 = vmul.f32 %v439, %v439
          %v444 = vadd.f32 %v440, %v441
          %v445 = vadd.f32 %v444, %v442
          %v446 = vadd.f32 %v445, %v443
          %v447 = vrot.slane %v446, 4
          %v448 = vadd.f32 %v446, %v447
          %v449 = vrot.slane %v448, 2
          %v450 = vadd.f32 %v448, %v449
          %v451 = vrot.slane %v450, 1
          %v452 = vadd.f32 %v450, %v451
          %v453 = vmul.f32 %v452, %v434
          %v454 = vrsqrt.pop %v453
          %v455 = vmul.f32 %v453, %v454
          %vm456 = vcmp.eq.f32.partialorder %v453, inf
          %v457 = vsel %vm456, %v453, %v455
          %vm458 = vcmp.eq.f32.partialorder %v453, 0.0
          %v459 = vand.u32 %v453, 2147483648
          %v460 = vsel %vm458, %v459, %v457
          %v461 = vadd.f32 %v460, 1e-05
          %v462 = vrcp.pop %v461
          %v463 = vmul.f32 %v436, %v462
          %v464 = vmul.f32 %v437, %v462
          %v465 = vmul.f32 %v438, %v462
          %v466 = vmul.f32 %v439, %v462
          %v467 = vld [vmem:[%s2] sm:$0xff]
          %v468 = vld [vmem:[%s2 + $0x8] sm:$0xff]
          %v469 = vld [vmem:[%s2 + $0x10] sm:$0xff]
          %v470 = vld [vmem:[%s2 + $0x18] sm:$0xff]
          %472 = vset.pattern.permute.xlu0 0
          %473 = vperm.xlu0 %472, %v467
          %v474 = vpop.permute.xlu0 %473
          %477 = vset.pattern.permute.xlu0 0
          %478 = vperm.xlu0 %477, %v468
          %v479 = vpop.permute.xlu0 %478
          %482 = vset.pattern.permute.xlu0 0
          %483 = vperm.xlu0 %482, %v469
          %v484 = vpop.permute.xlu0 %483
          %487 = vset.pattern.permute.xlu0 0
          %488 = vperm.xlu0 %487, %v470
          %v489 = vpop.permute.xlu0 %488
          %v491 = vmul.f32 %v463, %v474
          %v492 = vmul.f32 %v464, %v479
          %v493 = vmul.f32 %v465, %v484
          %v494 = vmul.f32 %v466, %v489
          %v495 = vld [vmem:[%s3] sm:$0xff]
          %v496 = vld [vmem:[%s3 + $0x8] sm:$0xff]
          %v497 = vld [vmem:[%s3 + $0x10] sm:$0xff]
          %v498 = vld [vmem:[%s3 + $0x18] sm:$0xff]
          %500 = vset.pattern.permute.xlu0 0
          %501 = vperm.xlu0 %500, %v495
          %v502 = vpop.permute.xlu0 %501
          %505 = vset.pattern.permute.xlu0 0
          %506 = vperm.xlu0 %505, %v496
          %v507 = vpop.permute.xlu0 %506
          %510 = vset.pattern.permute.xlu0 0
          %511 = vperm.xlu0 %510, %v497
          %v512 = vpop.permute.xlu0 %511
          %515 = vset.pattern.permute.xlu0 0
          %516 = vperm.xlu0 %515, %v498
          %v517 = vpop.permute.xlu0 %516
          %v519 = vadd.f32 %v491, %v502
          %v520 = vadd.f32 %v492, %v507
          %v521 = vadd.f32 %v493, %v512
          %v522 = vadd.f32 %v494, %v517
          %v523 = vpack.c.bf16 %v520, %v519
          %v524 = vpack.c.bf16 %v522, %v521
          %v525 = vld [vmem:[#allocation11] sm:$0xf]
          %v526 = vld [vmem:[#allocation11 + $0x4] sm:$0xf]
          %v527 = vld [vmem:[#allocation11 + $0x8] sm:$0xf]
          %v528 = vld [vmem:[#allocation11 + $0xc] sm:$0xf]
          %v531 = vunpack.c.l.b16 %v525
          %v532 = vunpack.c.l.b16 %v526
          %v533 = vpack.c.b16 %v532, %v531
          %vm534 = vcmask 261120
          %v536 = vsel %vm534, %v533, 0
          %538 = vmatprep.subr.bf16.mxu0 0
          %539 = vmatpush1.bf16.msra.mxu0 0
          %540 = vmatprep.subr.bf16.mxu0 0
          %541 = vmatpush1.bf16.msra.mxu0 0
          %542 = vmatprep.subr.bf16.mxu0 0
          %543 = vmatpush1.bf16.msra.mxu0 0
          %544 = vmatprep.subr.bf16.mxu0 0
          %545 = vmatpush1.bf16.msra.mxu0 0
          %546 = vmatprep.subr.bf16.mxu0 0
          %547 = vmatpush1.bf16.msra.mxu0 0
          %548 = vmatprep.subr.bf16.mxu0 0
          %549 = vmatpush1.bf16.msra.mxu0 0
          %550 = vmatprep.subr.bf16.mxu0 0
          %551 = vmatpush1.bf16.msra.mxu0 %v524
          %552 = vmatprep.subr.bf16.mxu0 0
          %553 = vmatpush1.bf16.msra.mxu0 %v523
          %554 = vmatprep.subr.bf16.mxu0 0
          %555 = vmatpush2.bf16.msra.mxu0 0
          %556 = vmatprep.subr.bf16.mxu0 0
          %557 = vmatpush2.bf16.msra.mxu0 0
          %558 = vmatprep.subr.bf16.mxu0 0
          %559 = vmatpush2.bf16.msra.mxu0 0
          %560 = vmatprep.subr.bf16.mxu0 0
          %561 = vmatpush2.bf16.msra.mxu0 0
          %562 = vmatprep.subr.bf16.mxu0 0
          %563 = vmatpush2.bf16.msra.mxu0 0
          %564 = vmatprep.subr.bf16.mxu0 0
          %565 = vmatpush2.bf16.msra.mxu0 0
          %566 = vmatprep.subr.bf16.mxu0 0
          %567 = vmatpush2.bf16.msra.mxu0 0
          %568 = vmatprep.subr.bf16.mxu0 0
          %569 = vmatpush2.bf16.msra.mxu0 0
          %570 = vmatprep.mubr.bf16.mxu0 0
          %571 = vmatmul.mubr.bf16.gmra.mxu0 %v536
          %v572 = vpop.f32.mrf.mxu0
          %v573 = vadd.f32 0.0, %v572
          %v574 = vpop.f32.mrf.mxu0
          %v575 = vpop.f32.mrf.mxu0
          %v576 = vadd.f32 0.0, %v575
          %v577 = vpop.f32.mrf.mxu0
          %578 = vdwg.mxu0
          %v581 = vunpack.c.l.b16 %v527
          %v582 = vunpack.c.l.b16 %v528
          %v583 = vpack.c.b16 %v582, %v581
          %v585 = vsel %vm534, %v583, 0
          %587 = vmatprep.subr.bf16.mxu0 0
          %588 = vmatpush1.bf16.msra.mxu0 0
          %589 = vmatprep.subr.bf16.mxu0 0
          %590 = vmatpush1.bf16.msra.mxu0 0
          %591 = vmatprep.subr.bf16.mxu0 0
          %592 = vmatpush1.bf16.msra.mxu0 0
          %593 = vmatprep.subr.bf16.mxu0 0
          %594 = vmatpush1.bf16.msra.mxu0 0
          %595 = vmatprep.subr.bf16.mxu0 0
          %596 = vmatpush1.bf16.msra.mxu0 0
          %597 = vmatprep.subr.bf16.mxu0 0
          %598 = vmatpush1.bf16.msra.mxu0 0
          %599 = vmatprep.subr.bf16.mxu0 0
          %600 = vmatpush1.bf16.msra.mxu0 %v524
          %601 = vmatprep.subr.bf16.mxu0 0
          %602 = vmatpush1.bf16.msra.mxu0 %v523
          %603 = vmatprep.subr.bf16.mxu0 0
          %604 = vmatpush2.bf16.msra.mxu0 0
          %605 = vmatprep.subr.bf16.mxu0 0
          %606 = vmatpush2.bf16.msra.mxu0 0
          %607 = vmatprep.subr.bf16.mxu0 0
          %608 = vmatpush2.bf16.msra.mxu0 0
          %609 = vmatprep.subr.bf16.mxu0 0
          %610 = vmatpush2.bf16.msra.mxu0 0
          %611 = vmatprep.subr.bf16.mxu0 0
          %612 = vmatpush2.bf16.msra.mxu0 0
          %613 = vmatprep.subr.bf16.mxu0 0
          %614 = vmatpush2.bf16.msra.mxu0 0
          %615 = vmatprep.subr.bf16.mxu0 0
          %616 = vmatpush2.bf16.msra.mxu0 0
          %617 = vmatprep.subr.bf16.mxu0 0
          %618 = vmatpush2.bf16.msra.mxu0 0
          %619 = vmatprep.mubr.bf16.mxu0 0
          %620 = vmatmul.mubr.bf16.gmra.mxu0 %v585
          %v621 = vpop.f32.mrf.mxu0
          %v622 = vadd.f32 0.0, %v621
          %v623 = vpop.f32.mrf.mxu0
          %v624 = vpop.f32.mrf.mxu0
          %v625 = vadd.f32 0.0, %v624
          %v626 = vpop.f32.mrf.mxu0
          %627 = vdwg.mxu0
          %v628 = vpack.c.bf16 %v576, %v573
          %v629 = vpack.c.bf16 %v625, %v622
          %v632 = vunpack.c.l.b16 %v628
          %v633 = vunpack.c.h.b16 %v628
          %v634 = vunpack.c.l.b16 %v629
          %v635 = vunpack.c.h.b16 %v629
          %v636 = vpack.c.b16 %v632, %v632
          %v637 = vpack.c.b16 %v633, %v633
          %v638 = vpack.c.b16 %v634, %v634
          %v639 = vpack.c.b16 %v635, %v635
          %644 = vst [vmem:[#allocation2] sm:$0xf] %v636
          %645 = vst [vmem:[#allocation2 + $0x4] sm:$0xf] %v637
          %646 = vst [vmem:[#allocation2 + $0x8] sm:$0xf] %v638
          %647 = vst [vmem:[#allocation2 + $0xc] sm:$0xf] %v639
          %648 = vst [vmem:[#allocation3] sm:$0x1] -inf
          %649 = vst [vmem:[#allocation3 + $0x1] sm:$0x1] -inf
          %650 = vst [vmem:[#allocation4] sm:$0x1] 0.0
          %651 = vst [vmem:[#allocation4 + $0x1] sm:$0x1] 0.0
          %652 = vst [vmem:[#allocation5] sm:$0xff] 0.0
          %653 = vst [vmem:[#allocation5 + $0x8] sm:$0xff] 0.0
          %654 = vst [vmem:[#allocation5 + $0x10] sm:$0xff] 0.0
          %655 = vst [vmem:[#allocation5 + $0x18] sm:$0xff] 0.0
        $region68: #{tpu_custom_call.1} parent=51 // pred_fallthru
          _
        %p656 = scmp.eq.s32.totalorder %s32, 0
        // Predicated region
        $region69: #{tpu_custom_call.1} parent=51 // pred_check
          %p657 = pneg %p656
        $region70: #{tpu_custom_call.1} parent=51 // pred_check_branch
          %659 = sbr.rel (%p657) target = $region72
        $region71: #{tpu_custom_call.1} parent=51 // pred_region
          %v660 = vld [vmem:[%s357] sm:$0xff]
          %v661 = vld [vmem:[%s357 + $0x8] sm:$0xff]
          %v662 = vld [vmem:[%s357 + $0x10] sm:$0xff]
          %v663 = vld [vmem:[%s357 + $0x18] sm:$0xff]
          %v664 = vadd.f32 %v660, %v661
          %v665 = vadd.f32 %v664, %v662
          %v666 = vadd.f32 %v665, %v663
          %v667 = vrot.slane %v666, 4
          %v668 = vadd.f32 %v666, %v667
          %v669 = vrot.slane %v668, 2
          %v670 = vadd.f32 %v668, %v669
          %v671 = vrot.slane %v670, 1
          %v672 = vadd.f32 %v670, %v671
          %v673 = vrcp.pop 32.0
          %v674 = vmul.f32 %v672, %v673
          %v675 = vsub.f32 %v660, %v674
          %v676 = vsub.f32 %v661, %v674
          %v677 = vsub.f32 %v662, %v674
          %v678 = vsub.f32 %v663, %v674
          %v679 = vmul.f32 %v675, %v675
          %v680 = vmul.f32 %v676, %v676
          %v681 = vmul.f32 %v677, %v677
          %v682 = vmul.f32 %v678, %v678
          %v683 = vadd.f32 %v679, %v680
          %v684 = vadd.f32 %v683, %v681
          %v685 = vadd.f32 %v684, %v682
          %v686 = vrot.slane %v685, 4
          %v687 = vadd.f32 %v685, %v686
          %v688 = vrot.slane %v687, 2
          %v689 = vadd.f32 %v687, %v688
          %v690 = vrot.slane %v689, 1
          %v691 = vadd.f32 %v689, %v690
          %v692 = vmul.f32 %v691, %v673
          %v693 = vrsqrt.pop %v692
          %v694 = vmul.f32 %v692, %v693
          %vm695 = vcmp.eq.f32.partialorder %v692, inf
          %v696 = vsel %vm695, %v692, %v694
          %vm697 = vcmp.eq.f32.partialorder %v692, 0.0
          %v698 = vand.u32 %v692, 2147483648
          %v699 = vsel %vm697, %v698, %v696
          %v700 = vadd.f32 %v699, 1e-05
          %v701 = vrcp.pop %v700
          %v702 = vmul.f32 %v675, %v701
          %v703 = vmul.f32 %v676, %v701
          %v704 = vmul.f32 %v677, %v701
          %v705 = vmul.f32 %v678, %v701
          %v706 = vld [vmem:[%s2] sm:$0xff]
          %v707 = vld [vmem:[%s2 + $0x8] sm:$0xff]
          %v708 = vld [vmem:[%s2 + $0x10] sm:$0xff]
          %v709 = vld [vmem:[%s2 + $0x18] sm:$0xff]
          %711 = vset.pattern.permute.xlu0 0
          %712 = vperm.xlu0 %711, %v706
          %v713 = vpop.permute.xlu0 %712
          %716 = vset.pattern.permute.xlu0 0
          %717 = vperm.xlu0 %716, %v707
          %v718 = vpop.permute.xlu0 %717
          %721 = vset.pattern.permute.xlu0 0
          %722 = vperm.xlu0 %721, %v708
          %v723 = vpop.permute.xlu0 %722
          %726 = vset.pattern.permute.xlu0 0
          %727 = vperm.xlu0 %726, %v709
          %v728 = vpop.permute.xlu0 %727
          %v730 = vmul.f32 %v702, %v713
          %v731 = vmul.f32 %v703, %v718
          %v732 = vmul.f32 %v704, %v723
          %v733 = vmul.f32 %v705, %v728
          %v734 = vld [vmem:[%s3] sm:$0xff]
          %v735 = vld [vmem:[%s3 + $0x8] sm:$0xff]
          %v736 = vld [vmem:[%s3 + $0x10] sm:$0xff]
          %v737 = vld [vmem:[%s3 + $0x18] sm:$0xff]
          %739 = vset.pattern.permute.xlu0 0
          %740 = vperm.xlu0 %739, %v734
          %v741 = vpop.permute.xlu0 %740
          %744 = vset.pattern.permute.xlu0 0
          %745 = vperm.xlu0 %744, %v735
          %v746 = vpop.permute.xlu0 %745
          %749 = vset.pattern.permute.xlu0 0
          %750 = vperm.xlu0 %749, %v736
          %v751 = vpop.permute.xlu0 %750
          %754 = vset.pattern.permute.xlu0 0
          %755 = vperm.xlu0 %754, %v737
          %v756 = vpop.permute.xlu0 %755
          %v758 = vadd.f32 %v730, %v741
          %v759 = vadd.f32 %v731, %v746
          %v760 = vadd.f32 %v732, %v751
          %v761 = vadd.f32 %v733, %v756
          %v762 = vpack.c.bf16 %v759, %v758
          %v763 = vpack.c.bf16 %v761, %v760
          %v764 = vld [vmem:[%s5] sm:$0xf]
          %v765 = vld [vmem:[%s5 + $0x4] sm:$0xf]
          %v766 = vld [vmem:[%s5 + $0x8] sm:$0xf]
          %v767 = vld [vmem:[%s5 + $0xc] sm:$0xf]
          %v768 = vld [vmem:[%s5 + $0x10] sm:$0xf]
          %v769 = vld [vmem:[%s5 + $0x14] sm:$0xf]
          %v770 = vld [vmem:[%s5 + $0x18] sm:$0xf]
          %v771 = vld [vmem:[%s5 + $0x1c] sm:$0xf]
          %v776 = vunpack.c.l.b16 %v764
          %v777 = vunpack.c.l.b16 %v765
          %v778 = vunpack.c.l.b16 %v766
          %v779 = vunpack.c.l.b16 %v767
          %v780 = vpack.c.b16 %v777, %v776
          %v781 = vpack.c.b16 %v779, %v778
          %vm782 = vcmask 261120
          %v784 = vsel %vm782, %v780, 0
          %v787 = vsel %vm782, %v781, 0
          %789 = vmatprep.subr.bf16.mxu0 0
          %790 = vmatpush1.bf16.msra.mxu0 0
          %791 = vmatprep.subr.bf16.mxu0 0
          %792 = vmatpush1.bf16.msra.mxu0 0
          %793 = vmatprep.subr.bf16.mxu0 0
          %794 = vmatpush1.bf16.msra.mxu0 0
          %795 = vmatprep.subr.bf16.mxu0 0
          %796 = vmatpush1.bf16.msra.mxu0 0
          %797 = vmatprep.subr.bf16.mxu0 0
          %798 = vmatpush1.bf16.msra.mxu0 0
          %799 = vmatprep.subr.bf16.mxu0 0
          %800 = vmatpush1.bf16.msra.mxu0 0
          %801 = vmatprep.subr.bf16.mxu0 0
          %802 = vmatpush1.bf16.msra.mxu0 %v763
          %803 = vmatprep.subr.bf16.mxu0 0
          %804 = vmatpush1.bf16.msra.mxu0 %v762
          %805 = vmatprep.subr.bf16.mxu0 0
          %806 = vmatpush2.bf16.msra.mxu0 0
          %807 = vmatprep.subr.bf16.mxu0 0
          %808 = vmatpush2.bf16.msra.mxu0 0
          %809 = vmatprep.subr.bf16.mxu0 0
          %810 = vmatpush2.bf16.msra.mxu0 0
          %811 = vmatprep.subr.bf16.mxu0 0
          %812 = vmatpush2.bf16.msra.mxu0 0
          %813 = vmatprep.subr.bf16.mxu0 0
          %814 = vmatpush2.bf16.msra.mxu0 0
          %815 = vmatprep.subr.bf16.mxu0 0
          %816 = vmatpush2.bf16.msra.mxu0 0
          %817 = vmatprep.subr.bf16.mxu0 0
          %818 = vmatpush2.bf16.msra.mxu0 0
          %819 = vmatprep.subr.bf16.mxu0 0
          %820 = vmatpush2.bf16.msra.mxu0 0
          %821 = vmatprep.mubr.bf16.mxu0 0
          %822 = vmatmul.mubr.bf16.gmra.mxu0 %v784
          %v823 = vpop.f32.mrf.mxu0
          %v824 = vadd.f32 0.0, %v823
          %v825 = vpop.f32.mrf.mxu0
          %v826 = vpop.f32.mrf.mxu0
          %v827 = vadd.f32 0.0, %v826
          %v828 = vpop.f32.mrf.mxu0
          %829 = vmatprep.mubr.bf16.mxu0 0
          %830 = vmatmul.mubr.bf16.gmra.mxu0 %v787
          %v831 = vpop.f32.mrf.mxu0
          %v832 = vadd.f32 0.0, %v831
          %v833 = vpop.f32.mrf.mxu0
          %v834 = vpop.f32.mrf.mxu0
          %v835 = vadd.f32 0.0, %v834
          %v836 = vpop.f32.mrf.mxu0
          %837 = vdwg.mxu0
          %v842 = vunpack.c.l.b16 %v768
          %v843 = vunpack.c.l.b16 %v769
          %v844 = vunpack.c.l.b16 %v770
          %v845 = vunpack.c.l.b16 %v771
          %v846 = vpack.c.b16 %v843, %v842
          %v847 = vpack.c.b16 %v845, %v844
          %v849 = vsel %vm782, %v846, 0
          %v852 = vsel %vm782, %v847, 0
          %854 = vmatprep.subr.bf16.mxu0 0
          %855 = vmatpush1.bf16.msra.mxu0 0
          %856 = vmatprep.subr.bf16.mxu0 0
          %857 = vmatpush1.bf16.msra.mxu0 0
          %858 = vmatprep.subr.bf16.mxu0 0
          %859 = vmatpush1.bf16.msra.mxu0 0
          %860 = vmatprep.subr.bf16.mxu0 0
          %861 = vmatpush1.bf16.msra.mxu0 0
          %862 = vmatprep.subr.bf16.mxu0 0
          %863 = vmatpush1.bf16.msra.mxu0 0
          %864 = vmatprep.subr.bf16.mxu0 0
          %865 = vmatpush1.bf16.msra.mxu0 0
          %866 = vmatprep.subr.bf16.mxu0 0
          %867 = vmatpush1.bf16.msra.mxu0 %v763
          %868 = vmatprep.subr.bf16.mxu0 0
          %869 = vmatpush1.bf16.msra.mxu0 %v762
          %870 = vmatprep.subr.bf16.mxu0 0
          %871 = vmatpush2.bf16.msra.mxu0 0
          %872 = vmatprep.subr.bf16.mxu0 0
          %873 = vmatpush2.bf16.msra.mxu0 0
          %874 = vmatprep.subr.bf16.mxu0 0
          %875 = vmatpush2.bf16.msra.mxu0 0
          %876 = vmatprep.subr.bf16.mxu0 0
          %877 = vmatpush2.bf16.msra.mxu0 0
          %878 = vmatprep.subr.bf16.mxu0 0
          %879 = vmatpush2.bf16.msra.mxu0 0
          %880 = vmatprep.subr.bf16.mxu0 0
          %881 = vmatpush2.bf16.msra.mxu0 0
          %882 = vmatprep.subr.bf16.mxu0 0
          %883 = vmatpush2.bf16.msra.mxu0 0
          %884 = vmatprep.subr.bf16.mxu0 0
          %885 = vmatpush2.bf16.msra.mxu0 0
          %886 = vmatprep.mubr.bf16.mxu0 0
          %887 = vmatmul.mubr.bf16.gmra.mxu0 %v849
          %v888 = vpop.f32.mrf.mxu0
          %v889 = vadd.f32 0.0, %v888
          %v890 = vpop.f32.mrf.mxu0
          %v891 = vpop.f32.mrf.mxu0
          %v892 = vadd.f32 0.0, %v891
          %v893 = vpop.f32.mrf.mxu0
          %894 = vmatprep.mubr.bf16.mxu0 0
          %895 = vmatmul.mubr.bf16.gmra.mxu0 %v852
          %v896 = vpop.f32.mrf.mxu0
          %v897 = vadd.f32 0.0, %v896
          %v898 = vpop.f32.mrf.mxu0
          %v899 = vpop.f32.mrf.mxu0
          %v900 = vadd.f32 0.0, %v899
          %v901 = vpop.f32.mrf.mxu0
          %902 = vdwg.mxu0
          %v903 = vpack.c.bf16 %v835, %v832
          %v904 = vpack.c.bf16 %v900, %v897
          %v907 = vunpack.c.l.b16 %v903
          %v908 = vunpack.c.h.b16 %v903
          %v909 = vunpack.c.l.b16 %v904
          %v910 = vunpack.c.h.b16 %v904
          %v911 = vpack.c.b16 %v907, %v907
          %v912 = vpack.c.b16 %v908, %v908
          %v913 = vpack.c.b16 %v909, %v909
          %v914 = vpack.c.b16 %v910, %v910
          %s919 = smul.u32 %s33, 4
          %s920 = smul.addr %s919, 4
          %s921 = scalar_lea.vmem [#allocation7], %s920
          %922 = vst [vmem:[%s921] sm:$0xf] %v911
          %923 = vst [vmem:[%s921 + $0x4] sm:$0xf] %v912
          %924 = vst [vmem:[%s921 + $0x8] sm:$0xf] %v913
          %925 = vst [vmem:[%s921 + $0xc] sm:$0xf] %v914
          %926 = vxpose.xlu0.b32.start [1/16] %v824, 128
          %927 = vxpose.xlu0.b32.cont [2/16] %v827, 128
          %928 = vxpose.xlu0.b32.cont [3/16] 0.0, 128
          %929 = vxpose.xlu0.b32.cont [4/16] 0.0, 128
          %930 = vxpose.xlu0.b32.cont [5/16] 0.0, 128
          %931 = vxpose.xlu0.b32.cont [6/16] 0.0, 128
          %932 = vxpose.xlu0.b32.cont [7/16] 0.0, 128
          %933 = vxpose.xlu0.b32.cont [8/16] 0.0, 128
          %934 = vxpose.xlu0.b32.cont [9/16] 0.0, 128
          %935 = vxpose.xlu0.b32.cont [10/16] 0.0, 128
          %936 = vxpose.xlu0.b32.cont [11/16] 0.0, 128
          %937 = vxpose.xlu0.b32.cont [12/16] 0.0, 128
          %938 = vxpose.xlu0.b32.cont [13/16] 0.0, 128
          %939 = vxpose.xlu0.b32.cont [14/16] 0.0, 128
          %940 = vxpose.xlu0.b32.cont [15/16] 0.0, 128
          %941 = vxpose.xlu0.b32.end [16/16] 0.0, 128
          %v942 = vpop.trf.xlu0
          %v943 = vpop.trf.xlu0
          %v944 = vpop.trf.xlu0
          %v945 = vpop.trf.xlu0
          %v946 = vpop.trf.xlu0
          %v947 = vpop.trf.xlu0
          %v948 = vpop.trf.xlu0
          %v949 = vpop.trf.xlu0
          %v950 = vpop.trf.xlu0
          %v951 = vpop.trf.xlu0
          %v952 = vpop.trf.xlu0
          %v953 = vpop.trf.xlu0
          %v954 = vpop.trf.xlu0
          %v955 = vpop.trf.xlu0
          %v956 = vpop.trf.xlu0
          %v957 = vpop.trf.xlu0
          %v958 = vpack.c.bf16 %v943, %v942
          %v959 = vpack.c.bf16 %v945, %v944
          %v960 = vpack.c.bf16 %v947, %v946
          %v961 = vpack.c.bf16 %v949, %v948
          %v962 = vpack.c.bf16 %v951, %v950
          %v963 = vpack.c.bf16 %v953, %v952
          %v964 = vpack.c.bf16 %v955, %v954
          %v965 = vpack.c.bf16 %v957, %v956
          %v974 = vunpack.c.l.b16 %v958
          %v975 = vunpack.c.h.b16 %v958
          %v976 = vunpack.c.l.b16 %v959
          %v977 = vunpack.c.h.b16 %v959
          %v978 = vunpack.c.l.b16 %v960
          %v979 = vunpack.c.h.b16 %v960
          %v980 = vunpack.c.l.b16 %v961
          %v981 = vunpack.c.h.b16 %v961
          %v982 = vunpack.c.l.b16 %v962
          %v983 = vunpack.c.h.b16 %v962
          %v984 = vunpack.c.l.b16 %v963
          %v985 = vunpack.c.h.b16 %v963
          %v986 = vunpack.c.l.b16 %v964
          %v987 = vunpack.c.h.b16 %v964
          %v988 = vunpack.c.l.b16 %v965
          %v989 = vunpack.c.h.b16 %v965
          %v990 = vpack.c.b16 %v974, %v974
          %v991 = vpack.c.b16 %v975, %v975
          %v992 = vpack.c.b16 %v976, %v976
          %v993 = vpack.c.b16 %v977, %v977
          %v994 = vpack.c.b16 %v978, %v978
          %v995 = vpack.c.b16 %v979, %v979
          %v996 = vpack.c.b16 %v980, %v980
          %v997 = vpack.c.b16 %v981, %v981
          %v998 = vpack.c.b16 %v982, %v982
          %v999 = vpack.c.b16 %v983, %v983
          %v1000 = vpack.c.b16 %v984, %v984
          %v1001 = vpack.c.b16 %v985, %v985
          %v1002 = vpack.c.b16 %v986, %v986
          %v1003 = vpack.c.b16 %v987, %v987
          %v1004 = vpack.c.b16 %v988, %v988
          %v1005 = vpack.c.b16 %v989, %v989
          %s1022 = smul.u32 %s33, 32
          %s1023 = smul.addr %s1022, 4
          %s1024 = scalar_lea.vmem [#allocation6], %s1023
          %vm1025 = vcmask 125952
          %1026 = vst.msk [vmem:[%s1024] sm:$0xf] %vm1025, %v990
          %1027 = vst.msk [vmem:[%s1024 + $0x4] sm:$0xf] %vm1025, %v991
          %1028 = vst.msk [vmem:[%s1024 + $0x8] sm:$0xf] %vm1025, %v992
          %1029 = vst.msk [vmem:[%s1024 + $0xc] sm:$0xf] %vm1025, %v993
          %1030 = vst.msk [vmem:[%s1024 + $0x10] sm:$0xf] %vm1025, %v994
          %1031 = vst.msk [vmem:[%s1024 + $0x14] sm:$0xf] %vm1025, %v995
          %1032 = vst.msk [vmem:[%s1024 + $0x18] sm:$0xf] %vm1025, %v996
          %1033 = vst.msk [vmem:[%s1024 + $0x1c] sm:$0xf] %vm1025, %v997
          %1034 = vst.msk [vmem:[%s1024 + $0x20] sm:$0xf] %vm1025, %v998
          %1035 = vst.msk [vmem:[%s1024 + $0x24] sm:$0xf] %vm1025, %v999
          %1036 = vst.msk [vmem:[%s1024 + $0x28] sm:$0xf] %vm1025, %v1000
          %1037 = vst.msk [vmem:[%s1024 + $0x2c] sm:$0xf] %vm1025, %v1001
          %1038 = vst.msk [vmem:[%s1024 + $0x30] sm:$0xf] %vm1025, %v1002
          %1039 = vst.msk [vmem:[%s1024 + $0x34] sm:$0xf] %vm1025, %v1003
          %1040 = vst.msk [vmem:[%s1024 + $0x38] sm:$0xf] %vm1025, %v1004
          %1041 = vst.msk [vmem:[%s1024 + $0x3c] sm:$0xf] %vm1025, %v1005
          %1042 = vxpose.xlu0.b32.start [1/16] %v889, 128
          %1043 = vxpose.xlu0.b32.cont [2/16] %v892, 128
          %1044 = vxpose.xlu0.b32.cont [3/16] 0.0, 128
          %1045 = vxpose.xlu0.b32.cont [4/16] 0.0, 128
          %1046 = vxpose.xlu0.b32.cont [5/16] 0.0, 128
          %1047 = vxpose.xlu0.b32.cont [6/16] 0.0, 128
          %1048 = vxpose.xlu0.b32.cont [7/16] 0.0, 128
          %1049 = vxpose.xlu0.b32.cont [8/16] 0.0, 128
          %1050 = vxpose.xlu0.b32.cont [9/16] 0.0, 128
          %1051 = vxpose.xlu0.b32.cont [10/16] 0.0, 128
          %1052 = vxpose.xlu0.b32.cont [11/16] 0.0, 128
          %1053 = vxpose.xlu0.b32.cont [12/16] 0.0, 128
          %1054 = vxpose.xlu0.b32.cont [13/16] 0.0, 128
          %1055 = vxpose.xlu0.b32.cont [14/16] 0.0, 128
          %1056 = vxpose.xlu0.b32.cont [15/16] 0.0, 128
          %1057 = vxpose.xlu0.b32.end [16/16] 0.0, 128
          %v1058 = vpop.trf.xlu0
          %v1059 = vpop.trf.xlu0
          %v1060 = vpop.trf.xlu0
          %v1061 = vpop.trf.xlu0
          %v1062 = vpop.trf.xlu0
          %v1063 = vpop.trf.xlu0
          %v1064 = vpop.trf.xlu0
          %v1065 = vpop.trf.xlu0
          %v1066 = vpop.trf.xlu0
          %v1067 = vpop.trf.xlu0
          %v1068 = vpop.trf.xlu0
          %v1069 = vpop.trf.xlu0
          %v1070 = vpop.trf.xlu0
          %v1071 = vpop.trf.xlu0
          %v1072 = vpop.trf.xlu0
          %v1073 = vpop.trf.xlu0
          %v1074 = vpack.c.bf16 %v1059, %v1058
          %v1075 = vpack.c.bf16 %v1061, %v1060
          %v1076 = vpack.c.bf16 %v1063, %v1062
          %v1077 = vpack.c.bf16 %v1065, %v1064
          %v1078 = vpack.c.bf16 %v1067, %v1066
          %v1079 = vpack.c.bf16 %v1069, %v1068
          %v1080 = vpack.c.bf16 %v1071, %v1070
          %v1081 = vpack.c.bf16 %v1073, %v1072
          %v1090 = vunpack.c.l.b16 %v1074
          %v1091 = vunpack.c.h.b16 %v1074
          %v1092 = vunpack.c.l.b16 %v1075
          %v1093 = vunpack.c.h.b16 %v1075
          %v1094 = vunpack.c.l.b16 %v1076
          %v1095 = vunpack.c.h.b16 %v1076
          %v1096 = vunpack.c.l.b16 %v1077
          %v1097 = vunpack.c.h.b16 %v1077
          %v1098 = vunpack.c.l.b16 %v1078
          %v1099 = vunpack.c.h.b16 %v1078
          %v1100 = vunpack.c.l.b16 %v1079
          %v1101 = vunpack.c.h.b16 %v1079
          %v1102 = vunpack.c.l.b16 %v1080
          %v1103 = vunpack.c.h.b16 %v1080
          %v1104 = vunpack.c.l.b16 %v1081
          %v1105 = vunpack.c.h.b16 %v1081
          %v1106 = vpack.c.b16 %v1090, %v1090
          %v1107 = vpack.c.b16 %v1091, %v1091
          %v1108 = vpack.c.b16 %v1092, %v1092
          %v1109 = vpack.c.b16 %v1093, %v1093
          %v1110 = vpack.c.b16 %v1094, %v1094
          %v1111 = vpack.c.b16 %v1095, %v1095
          %v1112 = vpack.c.b16 %v1096, %v1096
          %v1113 = vpack.c.b16 %v1097, %v1097
          %v1114 = vpack.c.b16 %v1098, %v1098
          %v1115 = vpack.c.b16 %v1099, %v1099
          %v1116 = vpack.c.b16 %v1100, %v1100
          %v1117 = vpack.c.b16 %v1101, %v1101
          %v1118 = vpack.c.b16 %v1102, %v1102
          %v1119 = vpack.c.b16 %v1103, %v1103
          %v1120 = vpack.c.b16 %v1104, %v1104
          %v1121 = vpack.c.b16 %v1105, %v1105
          %s1138 = sadd.s32 16, %s1022
          %s1139 = smul.addr %s1138, 4
          %s1140 = scalar_lea.vmem [#allocation6], %s1139
          %1141 = vst.msk [vmem:[%s1140] sm:$0xf] %vm1025, %v1106
          %1142 = vst.msk [vmem:[%s1140 + $0x4] sm:$0xf] %vm1025, %v1107
          %1143 = vst.msk [vmem:[%s1140 + $0x8] sm:$0xf] %vm1025, %v1108
          %1144 = vst.msk [vmem:[%s1140 + $0xc] sm:$0xf] %vm1025, %v1109
          %1145 = vst.msk [vmem:[%s1140 + $0x10] sm:$0xf] %vm1025, %v1110
          %1146 = vst.msk [vmem:[%s1140 + $0x14] sm:$0xf] %vm1025, %v1111
          %1147 = vst.msk [vmem:[%s1140 + $0x18] sm:$0xf] %vm1025, %v1112
          %1148 = vst.msk [vmem:[%s1140 + $0x1c] sm:$0xf] %vm1025, %v1113
          %1149 = vst.msk [vmem:[%s1140 + $0x20] sm:$0xf] %vm1025, %v1114
          %1150 = vst.msk [vmem:[%s1140 + $0x24] sm:$0xf] %vm1025, %v1115
          %1151 = vst.msk [vmem:[%s1140 + $0x28] sm:$0xf] %vm1025, %v1116
          %1152 = vst.msk [vmem:[%s1140 + $0x2c] sm:$0xf] %vm1025, %v1117
          %1153 = vst.msk [vmem:[%s1140 + $0x30] sm:$0xf] %vm1025, %v1118
          %1154 = vst.msk [vmem:[%s1140 + $0x34] sm:$0xf] %vm1025, %v1119
          %1155 = vst.msk [vmem:[%s1140 + $0x38] sm:$0xf] %vm1025, %v1120
          %1156 = vst.msk [vmem:[%s1140 + $0x3c] sm:$0xf] %vm1025, %v1121
        $region72: #{tpu_custom_call.1} parent=51 // pred_fallthru
          _
        %s1157 = smul.u32 %s33, 32
        %s1158 = smul.addr %s1157, 4
        %s1159 = scalar_lea.vmem [#allocation6], %s1158
        %v1160 = vld [vmem:[%s1159] sm:$0xf]
        %v1161 = vld [vmem:[%s1159 + $0x4] sm:$0xf]
        %v1162 = vld [vmem:[%s1159 + $0x8] sm:$0xf]
        %v1163 = vld [vmem:[%s1159 + $0xc] sm:$0xf]
        %v1164 = vld [vmem:[%s1159 + $0x10] sm:$0xf]
        %v1165 = vld [vmem:[%s1159 + $0x14] sm:$0xf]
        %v1166 = vld [vmem:[%s1159 + $0x18] sm:$0xf]
        %v1167 = vld [vmem:[%s1159 + $0x1c] sm:$0xf]
        %v1168 = vld [vmem:[%s1159 + $0x20] sm:$0xf]
        %v1169 = vld [vmem:[%s1159 + $0x24] sm:$0xf]
        %v1170 = vld [vmem:[%s1159 + $0x28] sm:$0xf]
        %v1171 = vld [vmem:[%s1159 + $0x2c] sm:$0xf]
        %v1172 = vld [vmem:[%s1159 + $0x30] sm:$0xf]
        %v1173 = vld [vmem:[%s1159 + $0x34] sm:$0xf]
        %v1174 = vld [vmem:[%s1159 + $0x38] sm:$0xf]
        %v1175 = vld [vmem:[%s1159 + $0x3c] sm:$0xf]
        %v1176 = vld [vmem:[%s1159 + $0x40] sm:$0xf]
        %v1177 = vld [vmem:[%s1159 + $0x44] sm:$0xf]
        %v1178 = vld [vmem:[%s1159 + $0x48] sm:$0xf]
        %v1179 = vld [vmem:[%s1159 + $0x4c] sm:$0xf]
        %v1180 = vld [vmem:[%s1159 + $0x50] sm:$0xf]
        %v1181 = vld [vmem:[%s1159 + $0x54] sm:$0xf]
        %v1182 = vld [vmem:[%s1159 + $0x58] sm:$0xf]
        %v1183 = vld [vmem:[%s1159 + $0x5c] sm:$0xf]
        %v1184 = vld [vmem:[%s1159 + $0x60] sm:$0xf]
        %v1185 = vld [vmem:[%s1159 + $0x64] sm:$0xf]
        %v1186 = vld [vmem:[%s1159 + $0x68] sm:$0xf]
        %v1187 = vld [vmem:[%s1159 + $0x6c] sm:$0xf]
        %v1188 = vld [vmem:[%s1159 + $0x70] sm:$0xf]
        %v1189 = vld [vmem:[%s1159 + $0x74] sm:$0xf]
        %v1190 = vld [vmem:[%s1159 + $0x78] sm:$0xf]
        %v1191 = vld [vmem:[%s1159 + $0x7c] sm:$0xf]
        %s1192 = smul.u32 %s33, 4
        %s1193 = smul.addr %s1192, 4
        %s1194 = scalar_lea.vmem [#allocation7], %s1193
        %v1195 = vld [vmem:[%s1194] sm:$0xf]
        %v1196 = vld [vmem:[%s1194 + $0x4] sm:$0xf]
        %v1197 = vld [vmem:[%s1194 + $0x8] sm:$0xf]
        %v1198 = vld [vmem:[%s1194 + $0xc] sm:$0xf]
        %v1199 = vld [vmem:[#allocation2] sm:$0xf]
        %v1200 = vld [vmem:[#allocation2 + $0x4] sm:$0xf]
        %v1201 = vld [vmem:[#allocation2 + $0x8] sm:$0xf]
        %v1202 = vld [vmem:[#allocation2 + $0xc] sm:$0xf]
        %v1219 = vunpack.c.l.b16 %v1160
        %v1220 = vunpack.c.l.b16 %v1161
        %v1221 = vunpack.c.l.b16 %v1162
        %v1222 = vunpack.c.l.b16 %v1163
        %v1223 = vunpack.c.l.b16 %v1164
        %v1224 = vunpack.c.l.b16 %v1165
        %v1225 = vunpack.c.l.b16 %v1166
        %v1226 = vunpack.c.l.b16 %v1167
        %v1227 = vunpack.c.l.b16 %v1168
        %v1228 = vunpack.c.l.b16 %v1169
        %v1229 = vunpack.c.l.b16 %v1170
        %v1230 = vunpack.c.l.b16 %v1171
        %v1231 = vunpack.c.l.b16 %v1172
        %v1232 = vunpack.c.l.b16 %v1173
        %v1233 = vunpack.c.l.b16 %v1174
        %v1234 = vunpack.c.l.b16 %v1175
        %v1235 = vpack.c.b16 %v1220, %v1219
        %v1236 = vpack.c.b16 %v1222, %v1221
        %v1237 = vpack.c.b16 %v1224, %v1223
        %v1238 = vpack.c.b16 %v1226, %v1225
        %v1239 = vpack.c.b16 %v1228, %v1227
        %v1240 = vpack.c.b16 %v1230, %v1229
        %v1241 = vpack.c.b16 %v1232, %v1231
        %v1242 = vpack.c.b16 %v1234, %v1233
        %v1245 = vunpack.c.l.b16 %v1199
        %v1246 = vunpack.c.l.b16 %v1200
        %v1247 = vpack.c.b16 %v1246, %v1245
        %vm1249 = vcmask 130048
        %v1251 = vsel %vm1249, %v1235, 0
        %v1254 = vsel %vm1249, %v1236, 0
        %v1257 = vsel %vm1249, %v1237, 0
        %v1260 = vsel %vm1249, %v1238, 0
        %v1263 = vsel %vm1249, %v1239, 0
        %v1266 = vsel %vm1249, %v1240, 0
        %v1269 = vsel %vm1249, %v1241, 0
        %v1272 = vsel %vm1249, %v1242, 0
        %1274 = vmatprep.subr.bf16.mxu0 0
        %1275 = vmatpush1.bf16.msra.mxu0 0
        %1276 = vmatprep.subr.bf16.mxu0 0
        %1277 = vmatpush1.bf16.msra.mxu0 0
        %1278 = vmatprep.subr.bf16.mxu0 0
        %1279 = vmatpush1.bf16.msra.mxu0 0
        %1280 = vmatprep.subr.bf16.mxu0 0
        %1281 = vmatpush1.bf16.msra.mxu0 0
        %1282 = vmatprep.subr.bf16.mxu0 0
        %1283 = vmatpush1.bf16.msra.mxu0 0
        %1284 = vmatprep.subr.bf16.mxu0 0
        %1285 = vmatpush1.bf16.msra.mxu0 0
        %1286 = vmatprep.subr.bf16.mxu0 0
        %1287 = vmatpush1.bf16.msra.mxu0 0
        %1288 = vmatprep.subr.bf16.mxu0 0
        %1289 = vmatpush1.bf16.msra.mxu0 %v1247
        %1290 = vmatprep.subr.bf16.mxu0 0
        %1291 = vmatpush2.bf16.msra.mxu0 0
        %1292 = vmatprep.subr.bf16.mxu0 0
        %1293 = vmatpush2.bf16.msra.mxu0 0
        %1294 = vmatprep.subr.bf16.mxu0 0
        %1295 = vmatpush2.bf16.msra.mxu0 0
        %1296 = vmatprep.subr.bf16.mxu0 0
        %1297 = vmatpush2.bf16.msra.mxu0 0
        %1298 = vmatprep.subr.bf16.mxu0 0
        %1299 = vmatpush2.bf16.msra.mxu0 0
        %1300 = vmatprep.subr.bf16.mxu0 0
        %1301 = vmatpush2.bf16.msra.mxu0 0
        %1302 = vmatprep.subr.bf16.mxu0 0
        %1303 = vmatpush2.bf16.msra.mxu0 0
        %1304 = vmatprep.subr.bf16.mxu0 0
        %1305 = vmatpush2.bf16.msra.mxu0 0
        %1306 = vmatprep.mubr.bf16.mxu0 0
        %1307 = vmatmul.mubr.bf16.gmra.mxu0 %v1251
        %v1308 = vpop.f32.mrf.mxu0
        %v1309 = vadd.f32 0.0, %v1308
        %v1310 = vpop.f32.mrf.mxu0
        %v1311 = vpop.f32.mrf.mxu0
        %v1312 = vadd.f32 0.0, %v1311
        %v1313 = vpop.f32.mrf.mxu0
        %1314 = vmatprep.mubr.bf16.mxu0 0
        %1315 = vmatmul.mubr.bf16.gmra.mxu0 %v1254
        %v1316 = vpop.f32.mrf.mxu0
        %v1317 = vadd.f32 0.0, %v1316
        %v1318 = vpop.f32.mrf.mxu0
        %v1319 = vpop.f32.mrf.mxu0
        %v1320 = vadd.f32 0.0, %v1319
        %v1321 = vpop.f32.mrf.mxu0
        %1322 = vmatprep.mubr.bf16.mxu0 0
        %1323 = vmatmul.mubr.bf16.gmra.mxu0 %v1257
        %v1324 = vpop.f32.mrf.mxu0
        %v1325 = vadd.f32 0.0, %v1324
        %v1326 = vpop.f32.mrf.mxu0
        %v1327 = vpop.f32.mrf.mxu0
        %v1328 = vadd.f32 0.0, %v1327
        %v1329 = vpop.f32.mrf.mxu0
        %1330 = vmatprep.mubr.bf16.mxu0 0
        %1331 = vmatmul.mubr.bf16.gmra.mxu0 %v1260
        %v1332 = vpop.f32.mrf.mxu0
        %v1333 = vadd.f32 0.0, %v1332
        %v1334 = vpop.f32.mrf.mxu0
        %v1335 = vpop.f32.mrf.mxu0
        %v1336 = vadd.f32 0.0, %v1335
        %v1337 = vpop.f32.mrf.mxu0
        %1338 = vmatprep.mubr.bf16.mxu0 0
        %1339 = vmatmul.mubr.bf16.gmra.mxu0 %v1263
        %v1340 = vpop.f32.mrf.mxu0
        %v1341 = vadd.f32 0.0, %v1340
        %v1342 = vpop.f32.mrf.mxu0
        %v1343 = vpop.f32.mrf.mxu0
        %v1344 = vadd.f32 0.0, %v1343
        %v1345 = vpop.f32.mrf.mxu0
        %1346 = vmatprep.mubr.bf16.mxu0 0
        %1347 = vmatmul.mubr.bf16.gmra.mxu0 %v1266
        %v1348 = vpop.f32.mrf.mxu0
        %v1349 = vadd.f32 0.0, %v1348
        %v1350 = vpop.f32.mrf.mxu0
        %v1351 = vpop.f32.mrf.mxu0
        %v1352 = vadd.f32 0.0, %v1351
        %v1353 = vpop.f32.mrf.mxu0
        %1354 = vmatprep.mubr.bf16.mxu0 0
        %1355 = vmatmul.mubr.bf16.gmra.mxu0 %v1269
        %v1356 = vpop.f32.mrf.mxu0
        %v1357 = vadd.f32 0.0, %v1356
        %v1358 = vpop.f32.mrf.mxu0
        %v1359 = vpop.f32.mrf.mxu0
        %v1360 = vadd.f32 0.0, %v1359
        %v1361 = vpop.f32.mrf.mxu0
        %1362 = vmatprep.mubr.bf16.mxu0 0
        %1363 = vmatmul.mubr.bf16.gmra.mxu0 %v1272
        %v1364 = vpop.f32.mrf.mxu0
        %v1365 = vadd.f32 0.0, %v1364
        %v1366 = vpop.f32.mrf.mxu0
        %v1367 = vpop.f32.mrf.mxu0
        %v1368 = vadd.f32 0.0, %v1367
        %v1369 = vpop.f32.mrf.mxu0
        %1370 = vdwg.mxu0
        %v1387 = vunpack.c.l.b16 %v1176
        %v1388 = vunpack.c.l.b16 %v1177
        %v1389 = vunpack.c.l.b16 %v1178
        %v1390 = vunpack.c.l.b16 %v1179
        %v1391 = vunpack.c.l.b16 %v1180
        %v1392 = vunpack.c.l.b16 %v1181
        %v1393 = vunpack.c.l.b16 %v1182
        %v1394 = vunpack.c.l.b16 %v1183
        %v1395 = vunpack.c.l.b16 %v1184
        %v1396 = vunpack.c.l.b16 %v1185
        %v1397 = vunpack.c.l.b16 %v1186
        %v1398 = vunpack.c.l.b16 %v1187
        %v1399 = vunpack.c.l.b16 %v1188
        %v1400 = vunpack.c.l.b16 %v1189
        %v1401 = vunpack.c.l.b16 %v1190
        %v1402 = vunpack.c.l.b16 %v1191
        %v1403 = vpack.c.b16 %v1388, %v1387
        %v1404 = vpack.c.b16 %v1390, %v1389
        %v1405 = vpack.c.b16 %v1392, %v1391
        %v1406 = vpack.c.b16 %v1394, %v1393
        %v1407 = vpack.c.b16 %v1396, %v1395
        %v1408 = vpack.c.b16 %v1398, %v1397
        %v1409 = vpack.c.b16 %v1400, %v1399
        %v1410 = vpack.c.b16 %v1402, %v1401
        %v1413 = vunpack.c.l.b16 %v1201
        %v1414 = vunpack.c.l.b16 %v1202
        %v1415 = vpack.c.b16 %v1414, %v1413
        %v1418 = vsel %vm1249, %v1403, 0
        %v1421 = vsel %vm1249, %v1404, 0
        %v1424 = vsel %vm1249, %v1405, 0
        %v1427 = vsel %vm1249, %v1406, 0
        %v1430 = vsel %vm1249, %v1407, 0
        %v1433 = vsel %vm1249, %v1408, 0
        %v1436 = vsel %vm1249, %v1409, 0
        %v1439 = vsel %vm1249, %v1410, 0
        %1441 = vmatprep.subr.bf16.mxu0 0
        %1442 = vmatpush1.bf16.msra.mxu0 0
        %1443 = vmatprep.subr.bf16.mxu0 0
        %1444 = vmatpush1.bf16.msra.mxu0 0
        %1445 = vmatprep.subr.bf16.mxu0 0
        %1446 = vmatpush1.bf16.msra.mxu0 0
        %1447 = vmatprep.subr.bf16.mxu0 0
        %1448 = vmatpush1.bf16.msra.mxu0 0
        %1449 = vmatprep.subr.bf16.mxu0 0
        %1450 = vmatpush1.bf16.msra.mxu0 0
        %1451 = vmatprep.subr.bf16.mxu0 0
        %1452 = vmatpush1.bf16.msra.mxu0 0
        %1453 = vmatprep.subr.bf16.mxu0 0
        %1454 = vmatpush1.bf16.msra.mxu0 0
        %1455 = vmatprep.subr.bf16.mxu0 0
        %1456 = vmatpush1.bf16.msra.mxu0 %v1415
        %1457 = vmatprep.subr.bf16.mxu0 0
        %1458 = vmatpush2.bf16.msra.mxu0 0
        %1459 = vmatprep.subr.bf16.mxu0 0
        %1460 = vmatpush2.bf16.msra.mxu0 0
        %1461 = vmatprep.subr.bf16.mxu0 0
        %1462 = vmatpush2.bf16.msra.mxu0 0
        %1463 = vmatprep.subr.bf16.mxu0 0
        %1464 = vmatpush2.bf16.msra.mxu0 0
        %1465 = vmatprep.subr.bf16.mxu0 0
        %1466 = vmatpush2.bf16.msra.mxu0 0
        %1467 = vmatprep.subr.bf16.mxu0 0
        %1468 = vmatpush2.bf16.msra.mxu0 0
        %1469 = vmatprep.subr.bf16.mxu0 0
        %1470 = vmatpush2.bf16.msra.mxu0 0
        %1471 = vmatprep.subr.bf16.mxu0 0
        %1472 = vmatpush2.bf16.msra.mxu0 0
        %1473 = vmatprep.mubr.bf16.mxu0 0
        %1474 = vmatmul.mubr.bf16.gmra.mxu0 %v1418
        %v1475 = vpop.f32.mrf.mxu0
        %v1476 = vadd.f32 0.0, %v1475
        %v1477 = vpop.f32.mrf.mxu0
        %v1478 = vpop.f32.mrf.mxu0
        %v1479 = vadd.f32 0.0, %v1478
        %v1480 = vpop.f32.mrf.mxu0
        %1481 = vmatprep.mubr.bf16.mxu0 0
        %1482 = vmatmul.mubr.bf16.gmra.mxu0 %v1421
        %v1483 = vpop.f32.mrf.mxu0
        %v1484 = vadd.f32 0.0, %v1483
        %v1485 = vpop.f32.mrf.mxu0
        %v1486 = vpop.f32.mrf.mxu0
        %v1487 = vadd.f32 0.0, %v1486
        %v1488 = vpop.f32.mrf.mxu0
        %1489 = vmatprep.mubr.bf16.mxu0 0
        %1490 = vmatmul.mubr.bf16.gmra.mxu0 %v1424
        %v1491 = vpop.f32.mrf.mxu0
        %v1492 = vadd.f32 0.0, %v1491
        %v1493 = vpop.f32.mrf.mxu0
        %v1494 = vpop.f32.mrf.mxu0
        %v1495 = vadd.f32 0.0, %v1494
        %v1496 = vpop.f32.mrf.mxu0
        %1497 = vmatprep.mubr.bf16.mxu0 0
        %1498 = vmatmul.mubr.bf16.gmra.mxu0 %v1427
        %v1499 = vpop.f32.mrf.mxu0
        %v1500 = vadd.f32 0.0, %v1499
        %v1501 = vpop.f32.mrf.mxu0
        %v1502 = vpop.f32.mrf.mxu0
        %v1503 = vadd.f32 0.0, %v1502
        %v1504 = vpop.f32.mrf.mxu0
        %1505 = vmatprep.mubr.bf16.mxu0 0
        %1506 = vmatmul.mubr.bf16.gmra.mxu0 %v1430
        %v1507 = vpop.f32.mrf.mxu0
        %v1508 = vadd.f32 0.0, %v1507
        %v1509 = vpop.f32.mrf.mxu0
        %v1510 = vpop.f32.mrf.mxu0
        %v1511 = vadd.f32 0.0, %v1510
        %v1512 = vpop.f32.mrf.mxu0
        %1513 = vmatprep.mubr.bf16.mxu0 0
        %1514 = vmatmul.mubr.bf16.gmra.mxu0 %v1433
        %v1515 = vpop.f32.mrf.mxu0
        %v1516 = vadd.f32 0.0, %v1515
        %v1517 = vpop.f32.mrf.mxu0
        %v1518 = vpop.f32.mrf.mxu0
        %v1519 = vadd.f32 0.0, %v1518
        %v1520 = vpop.f32.mrf.mxu0
        %1521 = vmatprep.mubr.bf16.mxu0 0
        %1522 = vmatmul.mubr.bf16.gmra.mxu0 %v1436
        %v1523 = vpop.f32.mrf.mxu0
        %v1524 = vadd.f32 0.0, %v1523
        %v1525 = vpop.f32.mrf.mxu0
        %v1526 = vpop.f32.mrf.mxu0
        %v1527 = vadd.f32 0.0, %v1526
        %v1528 = vpop.f32.mrf.mxu0
        %1529 = vmatprep.mubr.bf16.mxu0 0
        %1530 = vmatmul.mubr.bf16.gmra.mxu0 %v1439
        %v1531 = vpop.f32.mrf.mxu0
        %v1532 = vadd.f32 0.0, %v1531
        %v1533 = vpop.f32.mrf.mxu0
        %v1534 = vpop.f32.mrf.mxu0
        %v1535 = vadd.f32 0.0, %v1534
        %v1536 = vpop.f32.mrf.mxu0
        %1537 = vdwg.mxu0
        %s1538 = smul.u32 %s33, 128
        %v1539 = vlaneseq
        %v1540 = vshrl.u32 %v1539, 7
        %v1541 = vadd.s32 %v1540, 8
        %v1542 = vadd.s32 %v1540, 16
        %v1543 = vadd.s32 %v1540, 24
        %v1544 = vadd.s32 %v1540, 32
        %v1545 = vadd.s32 %v1540, 40
        %v1546 = vadd.s32 %v1540, 48
        %v1547 = vadd.s32 %v1540, 56
        %v1548 = vadd.s32 %v1540, 64
        %v1549 = vadd.s32 %v1540, 72
        %v1550 = vadd.s32 %v1540, 80
        %v1551 = vadd.s32 %v1540, 88
        %v1552 = vadd.s32 %v1540, 96
        %v1553 = vadd.s32 %v1540, 104
        %v1554 = vadd.s32 %v1540, 112
        %v1555 = vadd.s32 %v1540, 120
        %v1556 = vstv %s1538
        %v1557 = vadd.s32 %v1556, %v1540
        %v1558 = vadd.s32 %v1556, %v1541
        %v1559 = vadd.s32 %v1556, %v1542
        %v1560 = vadd.s32 %v1556, %v1543
        %v1561 = vadd.s32 %v1556, %v1544
        %v1562 = vadd.s32 %v1556, %v1545
        %v1563 = vadd.s32 %v1556, %v1546
        %v1564 = vadd.s32 %v1556, %v1547
        %v1565 = vadd.s32 %v1556, %v1548
        %v1566 = vadd.s32 %v1556, %v1549
        %v1567 = vadd.s32 %v1556, %v1550
        %v1568 = vadd.s32 %v1556, %v1551
        %v1569 = vadd.s32 %v1556, %v1552
        %v1570 = vadd.s32 %v1556, %v1553
        %v1571 = vadd.s32 %v1556, %v1554
        %v1572 = vadd.s32 %v1556, %v1555
        %vm1573 = vcmp.lt.s32.totalorder %v1557, 8
        %vm1574 = vcmp.lt.s32.totalorder %v1558, 8
        %vm1575 = vcmp.lt.s32.totalorder %v1559, 8
        %vm1576 = vcmp.lt.s32.totalorder %v1560, 8
        %vm1577 = vcmp.lt.s32.totalorder %v1561, 8
        %vm1578 = vcmp.lt.s32.totalorder %v1562, 8
        %vm1579 = vcmp.lt.s32.totalorder %v1563, 8
        %vm1580 = vcmp.lt.s32.totalorder %v1564, 8
        %vm1581 = vcmp.lt.s32.totalorder %v1565, 8
        %vm1582 = vcmp.lt.s32.totalorder %v1566, 8
        %vm1583 = vcmp.lt.s32.totalorder %v1567, 8
        %vm1584 = vcmp.lt.s32.totalorder %v1568, 8
        %vm1585 = vcmp.lt.s32.totalorder %v1569, 8
        %vm1586 = vcmp.lt.s32.totalorder %v1570, 8
        %vm1587 = vcmp.lt.s32.totalorder %v1571, 8
        %vm1588 = vcmp.lt.s32.totalorder %v1572, 8
        %v1589 = vsel %vm1573, 1, 0
        %v1590 = vsel %vm1574, 1, 0
        %v1591 = vsel %vm1575, 1, 0
        %v1592 = vsel %vm1576, 1, 0
        %v1593 = vsel %vm1577, 1, 0
        %v1594 = vsel %vm1578, 1, 0
        %v1595 = vsel %vm1579, 1, 0
        %v1596 = vsel %vm1580, 1, 0
        %v1597 = vsel %vm1581, 1, 0
        %v1598 = vsel %vm1582, 1, 0
        %v1599 = vsel %vm1583, 1, 0
        %v1600 = vsel %vm1584, 1, 0
        %v1601 = vsel %vm1585, 1, 0
        %v1602 = vsel %vm1586, 1, 0
        %v1603 = vsel %vm1587, 1, 0
        %v1604 = vsel %vm1588, 1, 0
        %vm1605 = vcmp.eq.s32.totalorder %v1589, 1
        %vm1606 = vcmp.eq.s32.totalorder %v1590, 1
        %vm1607 = vcmp.eq.s32.totalorder %v1591, 1
        %vm1608 = vcmp.eq.s32.totalorder %v1592, 1
        %vm1609 = vcmp.eq.s32.totalorder %v1593, 1
        %vm1610 = vcmp.eq.s32.totalorder %v1594, 1
        %vm1611 = vcmp.eq.s32.totalorder %v1595, 1
        %vm1612 = vcmp.eq.s32.totalorder %v1596, 1
        %vm1613 = vcmp.eq.s32.totalorder %v1597, 1
        %vm1614 = vcmp.eq.s32.totalorder %v1598, 1
        %vm1615 = vcmp.eq.s32.totalorder %v1599, 1
        %vm1616 = vcmp.eq.s32.totalorder %v1600, 1
        %vm1617 = vcmp.eq.s32.totalorder %v1601, 1
        %vm1618 = vcmp.eq.s32.totalorder %v1602, 1
        %vm1619 = vcmp.eq.s32.totalorder %v1603, 1
        %vm1620 = vcmp.eq.s32.totalorder %v1604, 1
        %v1621 = vsel %vm1605, %v1309, -1e+30
        %v1622 = vsel %vm1606, %v1312, -1e+30
        %v1623 = vsel %vm1607, %v1317, -1e+30
        %v1624 = vsel %vm1608, %v1320, -1e+30
        %v1625 = vsel %vm1609, %v1325, -1e+30
        %v1626 = vsel %vm1610, %v1328, -1e+30
        %v1627 = vsel %vm1611, %v1333, -1e+30
        %v1628 = vsel %vm1612, %v1336, -1e+30
        %v1629 = vsel %vm1613, %v1341, -1e+30
        %v1630 = vsel %vm1614, %v1344, -1e+30
        %v1631 = vsel %vm1615, %v1349, -1e+30
        %v1632 = vsel %vm1616, %v1352, -1e+30
        %v1633 = vsel %vm1617, %v1357, -1e+30
        %v1634 = vsel %vm1618, %v1360, -1e+30
        %v1635 = vsel %vm1619, %v1365, -1e+30
        %v1636 = vsel %vm1620, %v1368, -1e+30
        %v1637 = vsel %vm1605, %v1476, -1e+30
        %v1638 = vsel %vm1606, %v1479, -1e+30
        %v1639 = vsel %vm1607, %v1484, -1e+30
        %v1640 = vsel %vm1608, %v1487, -1e+30
        %v1641 = vsel %vm1609, %v1492, -1e+30
        %v1642 = vsel %vm1610, %v1495, -1e+30
        %v1643 = vsel %vm1611, %v1500, -1e+30
        %v1644 = vsel %vm1612, %v1503, -1e+30
        %v1645 = vsel %vm1613, %v1508, -1e+30
        %v1646 = vsel %vm1614, %v1511, -1e+30
        %v1647 = vsel %vm1615, %v1516, -1e+30
        %v1648 = vsel %vm1616, %v1519, -1e+30
        %v1649 = vsel %vm1617, %v1524, -1e+30
        %v1650 = vsel %vm1618, %v1527, -1e+30
        %v1651 = vsel %vm1619, %v1532, -1e+30
        %v1652 = vsel %vm1620, %v1535, -1e+30
        %v1653 = vld [vmem:[#allocation3] sm:$0x1]
        %v1654 = vld [vmem:[#allocation3 + $0x1] sm:$0x1]
        %v1655 = vmax.f32 %v1621, %v1623
        %v1656 = vmax.f32 %v1622, %v1624
        %v1657 = vmax.f32 %v1655, %v1625
        %v1658 = vmax.f32 %v1656, %v1626
        %v1659 = vmax.f32 %v1657, %v1627
        %v1660 = vmax.f32 %v1658, %v1628
        %v1661 = vmax.f32 %v1659, %v1629
        %v1662 = vmax.f32 %v1660, %v1630
        %v1663 = vmax.f32 %v1661, %v1631
        %v1664 = vmax.f32 %v1662, %v1632
        %v1665 = vmax.f32 %v1663, %v1633
        %v1666 = vmax.f32 %v1664, %v1634
        %v1667 = vmax.f32 %v1665, %v1635
        %v1668 = vmax.f32 %v1666, %v1636
        %v1669 = vmax.f32 %v1667, %v1668
        %v1670 = vrot.slane %v1669, 4
        %v1671 = vmax.f32 %v1669, %v1670
        %v1672 = vrot.slane %v1671, 2
        %v1673 = vmax.f32 %v1671, %v1672
        %v1674 = vrot.slane %v1673, 1
        %v1675 = vmax.f32 %v1673, %v1674
        %v1676 = vmax.f32 %v1637, %v1639
        %v1677 = vmax.f32 %v1638, %v1640
        %v1678 = vmax.f32 %v1676, %v1641
        %v1679 = vmax.f32 %v1677, %v1642
        %v1680 = vmax.f32 %v1678, %v1643
        %v1681 = vmax.f32 %v1679, %v1644
        %v1682 = vmax.f32 %v1680, %v1645
        %v1683 = vmax.f32 %v1681, %v1646
        %v1684 = vmax.f32 %v1682, %v1647
        %v1685 = vmax.f32 %v1683, %v1648
        %v1686 = vmax.f32 %v1684, %v1649
        %v1687 = vmax.f32 %v1685, %v1650
        %v1688 = vmax.f32 %v1686, %v1651
        %v1689 = vmax.f32 %v1687, %v1652
        %v1690 = vmax.f32 %v1688, %v1689
        %v1691 = vrot.slane %v1690, 4
        %v1692 = vmax.f32 %v1690, %v1691
        %v1693 = vrot.slane %v1692, 2
        %v1694 = vmax.f32 %v1692, %v1693
        %v1695 = vrot.slane %v1694, 1
        %v1696 = vmax.f32 %v1694, %v1695
        %v1697 = vmax.f32 %v1653, %v1675
        %v1698 = vmax.f32 %v1654, %v1696
        %v1699 = vsub.f32 %v1653, %v1697
        %v1700 = vsub.f32 %v1654, %v1698
        %v1701 = vmul.f32 %v1699, 1.442695
        %v1702 = vpow.pop %v1701
        %v1703 = vmul.f32 %v1700, 1.442695
        %v1704 = vpow.pop %v1703
        %v1707 = vlaneseq
        %v1708 = vshrl.u32 %v1707, 7
        %v1709 = vsub.s32 0, %v1708
        %v1710 = vrot.slane %v1697, %v1709
        %v1711 = vlaneseq
        %v1712 = vshrl.u32 %v1711, 7
        %v1713 = vsub.s32 0, %v1712
        %v1714 = vrot.slane %v1698, %v1713
        %v1717 = vsub.f32 %v1621, %v1710
        %v1718 = vsub.f32 %v1622, %v1710
        %v1719 = vsub.f32 %v1623, %v1710
        %v1720 = vsub.f32 %v1624, %v1710
        %v1721 = vsub.f32 %v1625, %v1710
        %v1722 = vsub.f32 %v1626, %v1710
        %v1723 = vsub.f32 %v1627, %v1710
        %v1724 = vsub.f32 %v1628, %v1710
        %v1725 = vsub.f32 %v1629, %v1710
        %v1726 = vsub.f32 %v1630, %v1710
        %v1727 = vsub.f32 %v1631, %v1710
        %v1728 = vsub.f32 %v1632, %v1710
        %v1729 = vsub.f32 %v1633, %v1710
        %v1730 = vsub.f32 %v1634, %v1710
        %v1731 = vsub.f32 %v1635, %v1710
        %v1732 = vsub.f32 %v1636, %v1710
        %v1733 = vsub.f32 %v1637, %v1714
        %v1734 = vsub.f32 %v1638, %v1714
        %v1735 = vsub.f32 %v1639, %v1714
        %v1736 = vsub.f32 %v1640, %v1714
        %v1737 = vsub.f32 %v1641, %v1714
        %v1738 = vsub.f32 %v1642, %v1714
        %v1739 = vsub.f32 %v1643, %v1714
        %v1740 = vsub.f32 %v1644, %v1714
        %v1741 = vsub.f32 %v1645, %v1714
        %v1742 = vsub.f32 %v1646, %v1714
        %v1743 = vsub.f32 %v1647, %v1714
        %v1744 = vsub.f32 %v1648, %v1714
        %v1745 = vsub.f32 %v1649, %v1714
        %v1746 = vsub.f32 %v1650, %v1714
        %v1747 = vsub.f32 %v1651, %v1714
        %v1748 = vsub.f32 %v1652, %v1714
        %v1749 = vmul.f32 %v1717, 1.442695
        %v1750 = vpow.pop %v1749
        %v1751 = vmul.f32 %v1718, 1.442695
        %v1752 = vpow.pop %v1751
        %v1753 = vmul.f32 %v1719, 1.442695
        %v1754 = vpow.pop %v1753
        %v1755 = vmul.f32 %v1720, 1.442695
        %v1756 = vpow.pop %v1755
        %v1757 = vmul.f32 %v1721, 1.442695
        %v1758 = vpow.pop %v1757
        %v1759 = vmul.f32 %v1722, 1.442695
        %v1760 = vpow.pop %v1759
        %v1761 = vmul.f32 %v1723, 1.442695
        %v1762 = vpow.pop %v1761
        %v1763 = vmul.f32 %v1724, 1.442695
        %v1764 = vpow.pop %v1763
        %v1765 = vmul.f32 %v1725, 1.442695
        %v1766 = vpow.pop %v1765
        %v1767 = vmul.f32 %v1726, 1.442695
        %v1768 = vpow.pop %v1767
        %v1769 = vmul.f32 %v1727, 1.442695
        %v1770 = vpow.pop %v1769
        %v1771 = vmul.f32 %v1728, 1.442695
        %v1772 = vpow.pop %v1771
        %v1773 = vmul.f32 %v1729, 1.442695
        %v1774 = vpow.pop %v1773
        %v1775 = vmul.f32 %v1730, 1.442695
        %v1776 = vpow.pop %v1775
        %v1777 = vmul.f32 %v1731, 1.442695
        %v1778 = vpow.pop %v1777
        %v1779 = vmul.f32 %v1732, 1.442695
        %v1780 = vpow.pop %v1779
        %v1781 = vmul.f32 %v1733, 1.442695
        %v1782 = vpow.pop %v1781
        %v1783 = vmul.f32 %v1734, 1.442695
        %v1784 = vpow.pop %v1783
        %v1785 = vmul.f32 %v1735, 1.442695
        %v1786 = vpow.pop %v1785
        %v1787 = vmul.f32 %v1736, 1.442695
        %v1788 = vpow.pop %v1787
        %v1789 = vmul.f32 %v1737, 1.442695
        %v1790 = vpow.pop %v1789
        %v1791 = vmul.f32 %v1738, 1.442695
        %v1792 = vpow.pop %v1791
        %v1793 = vmul.f32 %v1739, 1.442695
        %v1794 = vpow.pop %v1793
        %v1795 = vmul.f32 %v1740, 1.442695
        %v1796 = vpow.pop %v1795
        %v1797 = vmul.f32 %v1741, 1.442695
        %v1798 = vpow.pop %v1797
        %v1799 = vmul.f32 %v1742, 1.442695
        %v1800 = vpow.pop %v1799
        %v1801 = vmul.f32 %v1743, 1.442695
        %v1802 = vpow.pop %v1801
        %v1803 = vmul.f32 %v1744, 1.442695
        %v1804 = vpow.pop %v1803
        %v1805 = vmul.f32 %v1745, 1.442695
        %v1806 = vpow.pop %v1805
        %v1807 = vmul.f32 %v1746, 1.442695
        %v1808 = vpow.pop %v1807
        %v1809 = vmul.f32 %v1747, 1.442695
        %v1810 = vpow.pop %v1809
        %v1811 = vmul.f32 %v1748, 1.442695
        %v1812 = vpow.pop %v1811
        %v1813 = vld [vmem:[#allocation4] sm:$0x1]
        %v1814 = vld [vmem:[#allocation4 + $0x1] sm:$0x1]
        %v1815 = vmul.f32 %v1702, %v1813
        %v1816 = vmul.f32 %v1704, %v1814
        %v1817 = vadd.f32 %v1750, %v1752
        %v1818 = vadd.f32 %v1817, %v1754
        %v1819 = vadd.f32 %v1818, %v1756
        %v1820 = vadd.f32 %v1819, %v1758
        %v1821 = vadd.f32 %v1820, %v1760
        %v1822 = vadd.f32 %v1821, %v1762
        %v1823 = vadd.f32 %v1822, %v1764
        %v1824 = vadd.f32 %v1823, %v1766
        %v1825 = vadd.f32 %v1824, %v1768
        %v1826 = vadd.f32 %v1825, %v1770
        %v1827 = vadd.f32 %v1826, %v1772
        %v1828 = vadd.f32 %v1827, %v1774
        %v1829 = vadd.f32 %v1828, %v1776
        %v1830 = vadd.f32 %v1829, %v1778
        %v1831 = vadd.f32 %v1830, %v1780
        %v1832 = vrot.slane %v1831, 4
        %v1833 = vadd.f32 %v1831, %v1832
        %v1834 = vrot.slane %v1833, 2
        %v1835 = vadd.f32 %v1833, %v1834
        %v1836 = vrot.slane %v1835, 1
        %v1837 = vadd.f32 %v1835, %v1836
        %v1838 = vadd.f32 %v1782, %v1784
        %v1839 = vadd.f32 %v1838, %v1786
        %v1840 = vadd.f32 %v1839, %v1788
        %v1841 = vadd.f32 %v1840, %v1790
        %v1842 = vadd.f32 %v1841, %v1792
        %v1843 = vadd.f32 %v1842, %v1794
        %v1844 = vadd.f32 %v1843, %v1796
        %v1845 = vadd.f32 %v1844, %v1798
        %v1846 = vadd.f32 %v1845, %v1800
        %v1847 = vadd.f32 %v1846, %v1802
        %v1848 = vadd.f32 %v1847, %v1804
        %v1849 = vadd.f32 %v1848, %v1806
        %v1850 = vadd.f32 %v1849, %v1808
        %v1851 = vadd.f32 %v1850, %v1810
        %v1852 = vadd.f32 %v1851, %v1812
        %v1853 = vrot.slane %v1852, 4
        %v1854 = vadd.f32 %v1852, %v1853
        %v1855 = vrot.slane %v1854, 2
        %v1856 = vadd.f32 %v1854, %v1855
        %v1857 = vrot.slane %v1856, 1
        %v1858 = vadd.f32 %v1856, %v1857
        %v1859 = vadd.f32 %v1815, %v1837
        %v1860 = vadd.f32 %v1816, %v1858
        %1861 = vst [vmem:[#allocation4] sm:$0x1] %v1859
        %1862 = vst [vmem:[#allocation4 + $0x1] sm:$0x1] %v1860
        %v1863 = vpack.c.bf16 %v1752, %v1750
        %v1864 = vpack.c.bf16 %v1756, %v1754
        %v1865 = vpack.c.bf16 %v1760, %v1758
        %v1866 = vpack.c.bf16 %v1764, %v1762
        %v1867 = vpack.c.bf16 %v1768, %v1766
        %v1868 = vpack.c.bf16 %v1772, %v1770
        %v1869 = vpack.c.bf16 %v1776, %v1774
        %v1870 = vpack.c.bf16 %v1780, %v1778
        %v1871 = vpack.c.bf16 %v1784, %v1782
        %v1872 = vpack.c.bf16 %v1788, %v1786
        %v1873 = vpack.c.bf16 %v1792, %v1790
        %v1874 = vpack.c.bf16 %v1796, %v1794
        %v1875 = vpack.c.bf16 %v1800, %v1798
        %v1876 = vpack.c.bf16 %v1804, %v1802
        %v1877 = vpack.c.bf16 %v1808, %v1806
        %v1878 = vpack.c.bf16 %v1812, %v1810
        %v1881 = vunpack.c.l.b16 %v1195
        %v1882 = vunpack.c.l.b16 %v1196
        %v1883 = vpack.c.b16 %v1882, %v1881
        %1885 = vmatprep.subr.bf16.mxu0 0
        %1886 = vmatpush1.bf16.msra.mxu0 %v1870
        %1887 = vmatprep.subr.bf16.mxu0 0
        %1888 = vmatpush1.bf16.msra.mxu0 %v1869
        %1889 = vmatprep.subr.bf16.mxu0 0
        %1890 = vmatpush1.bf16.msra.mxu0 %v1868
        %1891 = vmatprep.subr.bf16.mxu0 0
        %1892 = vmatpush1.bf16.msra.mxu0 %v1867
        %1893 = vmatprep.subr.bf16.mxu0 0
        %1894 = vmatpush1.bf16.msra.mxu0 %v1866
        %1895 = vmatprep.subr.bf16.mxu0 0
        %1896 = vmatpush1.bf16.msra.mxu0 %v1865
        %1897 = vmatprep.subr.bf16.mxu0 0
        %1898 = vmatpush1.bf16.msra.mxu0 %v1864
        %1899 = vmatprep.subr.bf16.mxu0 0
        %1900 = vmatpush1.bf16.msra.mxu0 %v1863
        %1901 = vmatprep.subr.bf16.mxu0 0
        %1902 = vmatpush2.bf16.msra.mxu0 0
        %1903 = vmatprep.subr.bf16.mxu0 0
        %1904 = vmatpush2.bf16.msra.mxu0 0
        %1905 = vmatprep.subr.bf16.mxu0 0
        %1906 = vmatpush2.bf16.msra.mxu0 0
        %1907 = vmatprep.subr.bf16.mxu0 0
        %1908 = vmatpush2.bf16.msra.mxu0 0
        %1909 = vmatprep.subr.bf16.mxu0 0
        %1910 = vmatpush2.bf16.msra.mxu0 0
        %1911 = vmatprep.subr.bf16.mxu0 0
        %1912 = vmatpush2.bf16.msra.mxu0 0
        %1913 = vmatprep.subr.bf16.mxu0 0
        %1914 = vmatpush2.bf16.msra.mxu0 0
        %1915 = vmatprep.subr.bf16.mxu0 0
        %1916 = vmatpush2.bf16.msra.mxu0 0
        %1917 = vmatprep.mubr.bf16.mxu0 0
        %1918 = vmatmul.mubr.bf16.gmra.mxu0 %v1883
        %v1919 = vpop.f32.mrf.mxu0
        %v1920 = vadd.f32 0.0, %v1919
        %v1921 = vpop.f32.mrf.mxu0
        %v1922 = vpop.f32.mrf.mxu0
        %v1923 = vadd.f32 0.0, %v1922
        %v1924 = vpop.f32.mrf.mxu0
        %1925 = vdwg.mxu0
        %v1928 = vunpack.c.l.b16 %v1197
        %v1929 = vunpack.c.l.b16 %v1198
        %v1930 = vpack.c.b16 %v1929, %v1928
        %1932 = vmatprep.subr.bf16.mxu0 0
        %1933 = vmatpush1.bf16.msra.mxu0 %v1878
        %1934 = vmatprep.subr.bf16.mxu0 0
        %1935 = vmatpush1.bf16.msra.mxu0 %v1877
        %1936 = vmatprep.subr.bf16.mxu0 0
        %1937 = vmatpush1.bf16.msra.mxu0 %v1876
        %1938 = vmatprep.subr.bf16.mxu0 0
        %1939 = vmatpush1.bf16.msra.mxu0 %v1875
        %1940 = vmatprep.subr.bf16.mxu0 0
        %1941 = vmatpush1.bf16.msra.mxu0 %v1874
        %1942 = vmatprep.subr.bf16.mxu0 0
        %1943 = vmatpush1.bf16.msra.mxu0 %v1873
        %1944 = vmatprep.subr.bf16.mxu0 0
        %1945 = vmatpush1.bf16.msra.mxu0 %v1872
        %1946 = vmatprep.subr.bf16.mxu0 0
        %1947 = vmatpush1.bf16.msra.mxu0 %v1871
        %1948 = vmatprep.subr.bf16.mxu0 0
        %1949 = vmatpush2.bf16.msra.mxu0 0
        %1950 = vmatprep.subr.bf16.mxu0 0
        %1951 = vmatpush2.bf16.msra.mxu0 0
        %1952 = vmatprep.subr.bf16.mxu0 0
        %1953 = vmatpush2.bf16.msra.mxu0 0
        %1954 = vmatprep.subr.bf16.mxu0 0
        %1955 = vmatpush2.bf16.msra.mxu0 0
        %1956 = vmatprep.subr.bf16.mxu0 0
        %1957 = vmatpush2.bf16.msra.mxu0 0
        %1958 = vmatprep.subr.bf16.mxu0 0
        %1959 = vmatpush2.bf16.msra.mxu0 0
        %1960 = vmatprep.subr.bf16.mxu0 0
        %1961 = vmatpush2.bf16.msra.mxu0 0
        %1962 = vmatprep.subr.bf16.mxu0 0
        %1963 = vmatpush2.bf16.msra.mxu0 0
        %1964 = vmatprep.mubr.bf16.mxu0 0
        %1965 = vmatmul.mubr.bf16.gmra.mxu0 %v1930
        %v1966 = vpop.f32.mrf.mxu0
        %v1967 = vadd.f32 0.0, %v1966
        %v1968 = vpop.f32.mrf.mxu0
        %v1969 = vpop.f32.mrf.mxu0
        %v1970 = vadd.f32 0.0, %v1969
        %v1971 = vpop.f32.mrf.mxu0
        %1972 = vdwg.mxu0
        %v1973 = vld [vmem:[#allocation5] sm:$0xff]
        %v1974 = vld [vmem:[#allocation5 + $0x8] sm:$0xff]
        %v1975 = vld [vmem:[#allocation5 + $0x10] sm:$0xff]
        %v1976 = vld [vmem:[#allocation5 + $0x18] sm:$0xff]
        %v1979 = vlaneseq
        %v1980 = vshrl.u32 %v1979, 7
        %v1981 = vsub.s32 0, %v1980
        %v1982 = vrot.slane %v1702, %v1981
        %v1983 = vlaneseq
        %v1984 = vshrl.u32 %v1983, 7
        %v1985 = vsub.s32 0, %v1984
        %v1986 = vrot.slane %v1704, %v1985
        %v1989 = vmul.f32 %v1982, %v1973
        %v1990 = vmul.f32 %v1982, %v1974
        %v1991 = vmul.f32 %v1986, %v1975
        %v1992 = vmul.f32 %v1986, %v1976
        %v1993 = vadd.f32 %v1989, %v1920
        %v1994 = vadd.f32 %v1990, %v1923
        %v1995 = vadd.f32 %v1991, %v1967
        %v1996 = vadd.f32 %v1992, %v1970
        %1997 = vst [vmem:[#allocation5] sm:$0xff] %v1993
        %1998 = vst [vmem:[#allocation5 + $0x8] sm:$0xff] %v1994
        %1999 = vst [vmem:[#allocation5 + $0x10] sm:$0xff] %v1995
        %2000 = vst [vmem:[#allocation5 + $0x18] sm:$0xff] %v1996
        %2001 = vst [vmem:[#allocation3] sm:$0x1] %v1697
        %2002 = vst [vmem:[#allocation3 + $0x1] sm:$0x1] %v1698
        // Predicated region
        $region73: #{tpu_custom_call.1} parent=51 // pred_check
          %p2003 = pneg %p417
        $region74: #{tpu_custom_call.1} parent=51 // pred_check_branch
          %2005 = sbr.rel (%p2003) target = $region76
        $region75: #{tpu_custom_call.1} parent=51 // pred_region
          %v2006 = vld [vmem:[#allocation4] sm:$0x1]
          %v2007 = vld [vmem:[#allocation4 + $0x1] sm:$0x1]
          %v2008 = vrcp.pop %v2006
          %v2009 = vrcp.pop %v2007
          %v2010 = vld [vmem:[#allocation5] sm:$0xff]
          %v2011 = vld [vmem:[#allocation5 + $0x8] sm:$0xff]
          %v2012 = vld [vmem:[#allocation5 + $0x10] sm:$0xff]
          %v2013 = vld [vmem:[#allocation5 + $0x18] sm:$0xff]
          %v2016 = vlaneseq
          %v2017 = vshrl.u32 %v2016, 7
          %v2018 = vsub.s32 0, %v2017
          %v2019 = vrot.slane %v2008, %v2018
          %v2020 = vlaneseq
          %v2021 = vshrl.u32 %v2020, 7
          %v2022 = vsub.s32 0, %v2021
          %v2023 = vrot.slane %v2009, %v2022
          %v2026 = vmul.f32 %v2010, %v2019
          %v2027 = vmul.f32 %v2011, %v2019
          %v2028 = vmul.f32 %v2012, %v2023
          %v2029 = vmul.f32 %v2013, %v2023
          %v2030 = vld [vmem:[#allocation13] sm:$0xf]
          %v2031 = vld [vmem:[#allocation13 + $0x4] sm:$0xf]
          %v2032 = vld [vmem:[#allocation13 + $0x8] sm:$0xf]
          %v2033 = vld [vmem:[#allocation13 + $0xc] sm:$0xf]
          %v2034 = vpack.c.bf16 %v2027, %v2026
          %v2035 = vpack.c.bf16 %v2029, %v2028
          %v2036 = vld [vmem:[%s7] sm:$0xff]
          %v2037 = vld [vmem:[%s7 + $0x8] sm:$0xff]
          %v2038 = vld [vmem:[%s7 + $0x10] sm:$0xff]
          %v2039 = vld [vmem:[%s7 + $0x18] sm:$0xff]
          %2041 = vset.pattern.permute.xlu0 0
          %2042 = vperm.xlu0 %2041, %v2036
          %v2043 = vpop.permute.xlu0 %2042
          %2046 = vset.pattern.permute.xlu0 0
          %2047 = vperm.xlu0 %2046, %v2037
          %v2048 = vpop.permute.xlu0 %2047
          %2051 = vset.pattern.permute.xlu0 0
          %2052 = vperm.xlu0 %2051, %v2038
          %v2053 = vpop.permute.xlu0 %2052
          %2056 = vset.pattern.permute.xlu0 0
          %2057 = vperm.xlu0 %2056, %v2039
          %v2058 = vpop.permute.xlu0 %2057
          %v2064 = vunpack.c.l.b16 %v2030
          %v2065 = vunpack.c.l.b16 %v2031
          %v2066 = vunpack.c.l.b16 %v2032
          %v2067 = vunpack.c.l.b16 %v2033
          %v2068 = vpack.c.b16 %v2065, %v2064
          %v2069 = vpack.c.b16 %v2067, %v2066
          %vm2070 = vcmask 261120
          %v2072 = vsel %vm2070, %v2068, 0
          %v2075 = vsel %vm2070, %v2069, 0
          %2077 = vmatprep.subr.bf16.mxu0 0
          %2078 = vmatpush1.bf16.msra.mxu0 0
          %2079 = vmatprep.subr.bf16.mxu0 0
          %2080 = vmatpush1.bf16.msra.mxu0 0
          %2081 = vmatprep.subr.bf16.mxu0 0
          %2082 = vmatpush1.bf16.msra.mxu0 0
          %2083 = vmatprep.subr.bf16.mxu0 0
          %2084 = vmatpush1.bf16.msra.mxu0 0
          %2085 = vmatprep.subr.bf16.mxu0 0
          %2086 = vmatpush1.bf16.msra.mxu0 0
          %2087 = vmatprep.subr.bf16.mxu0 0
          %2088 = vmatpush1.bf16.msra.mxu0 0
          %2089 = vmatprep.subr.bf16.mxu0 0
          %2090 = vmatpush1.bf16.msra.mxu0 %v2035
          %2091 = vmatprep.subr.bf16.mxu0 0
          %2092 = vmatpush1.bf16.msra.mxu0 %v2034
          %2093 = vmatprep.subr.bf16.mxu0 0
          %2094 = vmatpush2.bf16.msra.mxu0 0
          %2095 = vmatprep.subr.bf16.mxu0 0
          %2096 = vmatpush2.bf16.msra.mxu0 0
          %2097 = vmatprep.subr.bf16.mxu0 0
          %2098 = vmatpush2.bf16.msra.mxu0 0
          %2099 = vmatprep.subr.bf16.mxu0 0
          %2100 = vmatpush2.bf16.msra.mxu0 0
          %2101 = vmatprep.subr.bf16.mxu0 0
          %2102 = vmatpush2.bf16.msra.mxu0 0
          %2103 = vmatprep.subr.bf16.mxu0 0
          %2104 = vmatpush2.bf16.msra.mxu0 0
          %2105 = vmatprep.subr.bf16.mxu0 0
          %2106 = vmatpush2.bf16.msra.mxu0 0
          %2107 = vmatprep.subr.bf16.mxu0 0
          %2108 = vmatpush2.bf16.msra.mxu0 0
          %2109 = vmatprep.mubr.bf16.mxu0 0
          %2110 = vmatmul.mubr.bf16.gmra.mxu0 %v2072
          %v2111 = vpop.f32.mrf.mxu0
          %v2112 = vadd.f32 %v2043, %v2111
          %v2113 = vpop.f32.mrf.mxu0
          %v2114 = vpop.f32.mrf.mxu0
          %v2115 = vadd.f32 %v2048, %v2114
          %v2116 = vpop.f32.mrf.mxu0
          %2117 = vmatprep.mubr.bf16.mxu0 0
          %2118 = vmatmul.mubr.bf16.gmra.mxu0 %v2075
          %v2119 = vpop.f32.mrf.mxu0
          %v2120 = vadd.f32 %v2053, %v2119
          %v2121 = vpop.f32.mrf.mxu0
          %v2122 = vpop.f32.mrf.mxu0
          %v2123 = vadd.f32 %v2058, %v2122
          %v2124 = vpop.f32.mrf.mxu0
          %2125 = vdwg.mxu0
          %2126 = vst [vmem:[%s405] sm:$0xff] %v2112
          %2127 = vst [vmem:[%s405 + $0x8] sm:$0xff] %v2115
          %2128 = vst [vmem:[%s405 + $0x10] sm:$0xff] %v2120
          %2129 = vst [vmem:[%s405 + $0x18] sm:$0xff] %v2123
        $region76: #{tpu_custom_call.1} parent=51 // pred_fallthru
          _
        %s2130 = sand.u32 %s241, 1
        %s2131 = scalar_lea.sflag [#allocation10], %s2130
        %s2132 = sand.u32 %s241, 1
        %s2133 = smul.addr %s2132, 32
        %s2134 = scalar_lea.vmem [#allocation14], %s2133
        // Predicated region
        $region77: #{tpu_custom_call.1} parent=51 // pred_check
          %p2135 = pneg %p251
        $region78: #{tpu_custom_call.1} parent=51 // pred_check_branch
          %2137 = sbr.rel (%p2135) target = $region80
        $region79: #{tpu_custom_call.1} parent=51 // pred_region
          %s2139 = ssub.s32 512, 512
          %2140 = vsyncadd %s2131, %s2139
          %s2141 = smul.addr %s31, 4
          %s2142 = sadd.s32 %s32, %s2141
          %s2143 = smul.addr %s2142, 128
          %s2144 = scalar_lea.hbm %s8, %s2143
          %s2145 = sshll.u32 %s2134, 4
          %s2146 = int_to_ptr.vmem [resolvable:$true] %s2145
          %2151 = dma.vmem_to_hbm [thread:$0]  %s2146, 512, %s2144, %s2131, 128, 128, 8
        $region80: #{tpu_custom_call.1} parent=51 // pred_fallthru
          _
      $region52: #{tpu_custom_call.1} parent=5 // pred_fallthru
        _
      %p2152 = scmp.le.s32.totalorder 2, %s21
      // Predicated region
      $region81: #{tpu_custom_call.1} parent=5 // pred_check
        %p2153 = pneg %p2152
      $region82: #{tpu_custom_call.1} parent=5 // pred_check_branch
        %2155 = sbr.rel (%p2153) target = $region84
      $region83: #{tpu_custom_call.1} parent=5 // pred_region
        %s2156 = ssub.s32 %s21, 2
        // Predicated region
        $region85: #{tpu_custom_call.1} parent=83 // pred_check
          %p2157 = pneg %p257
        $region86: #{tpu_custom_call.1} parent=83 // pred_check_branch
          %2159 = sbr.rel (%p2157) target = $region88
        $region87: #{tpu_custom_call.1} parent=83 // pred_region
          %s2160 = sand.u32 %s242, 1
          %s2161 = scalar_lea.sflag [#allocation10], %s2160
          %s2162 = sand.u32 %s242, 1
          %s2163 = smul.addr %s2162, 32
          %s2164 = scalar_lea.vmem [#allocation14], %s2163
          %2165 = dma.done %s2161, 512
        $region88: #{tpu_custom_call.1} parent=83 // pred_fallthru
          _
      $region84: #{tpu_custom_call.1} parent=5 // pred_fallthru
        _
    $region6: #{tpu_custom_call.1} parent=1 // loop_footer
      %s25 = sadd.s32 1, %s21
    $region7: #{tpu_custom_call.1} parent=1 // loop_footer_branch
      %20 = sbr.rel target = $region3
    $region8: #{tpu_custom_call.1} parent=1 // loop_exit
      _
    %2166 = vsyncpa [#allocation9], 1
    %s2167 = scalar_lea.sflag [#allocation9], 1
    %2168 = vsyncpa %s2167, 1
    %2169 = vsyncpa [#allocation12], 1
    %2170 = vsyncpa [#allocation10], 1
    %s2171 = scalar_lea.sflag [#allocation10], 1
    %2172 = vsyncpa %s2171, 1

</llo_original>
